<compile_context>
chip_gen: v5e
topology: v5e:2x2
jax: 0.10.0
libtpu: 0.0.40
codegen_flags: <defaults>
</compile_context>

<pallas_src>
import functools
import math

import jax
import jax.numpy as jnp
from jax.experimental import pallas as pl
from jax.experimental.pallas import tpu as pltpu


def _mha_kernel(xq_ref, xk_ref, xv_ref,
                wqT_ref, bq_ref, wkT_ref, bk_ref, wvT_ref, bv_ref,
                woT_ref, bo_ref,
                o_ref, *, h, d_k, seq_len, batch_block):
    S = seq_len
    Bt = batch_block

    # ---- Input projections: one big 2-D MXU matmul per projection over all
    #      Bt*S rows in this block.  Weights are pre-transposed on the host and
    #      the 1/sqrt(d_k) scale is already folded into wqT/bq. ----
    xq = xq_ref[...]                                        # [Bt*S, D]
    xk = xk_ref[...]
    xv = xv_ref[...]

    q = jnp.dot(xq, wqT_ref[...], preferred_element_type=jnp.float32) + bq_ref[...]
    k = jnp.dot(xk, wkT_ref[...], preferred_element_type=jnp.float32) + bk_ref[...]
    v = jnp.dot(xv, wvT_ref[...], preferred_element_type=jnp.float32) + bv_ref[...]

    # ---- Gather (sequence, head) slices into a single leading batch axis so
    #      attention runs as two batched dot_generals instead of h tiny
    #      per-head MXU ops with unrolled live score matrices. ----
    def split_heads(x):
        parts = []
        for b in range(Bt):
            rows = x[b * S:(b + 1) * S, :]                  # [S, D]
            for i in range(h):
                parts.append(rows[:, i * d_k:(i + 1) * d_k])  # [S, d_k]
        return jnp.stack(parts, axis=0)                     # [Bt*h, S, d_k]

    qh = split_heads(q)
    kh = split_heads(k)
    vh = split_heads(v)

    # ---- Scaled dot-product attention, batched over (batch, head). ----
    scores = jnp.einsum('bqd,bkd->bqk', qh, kh,
                        preferred_element_type=jnp.float32)   # [Bt*h, S, S]
    scores = scores - jnp.max(scores, axis=-1, keepdims=True)
    probs = jnp.exp(scores)
    denom = jnp.sum(probs, axis=-1, keepdims=True)
    probs = probs * pl.reciprocal(denom, approx=True)         # EUP, not VPU div
    # (dropout on the attention probs is the identity in eval mode)
    ctx = jnp.einsum('bqk,bkd->bqd', probs, vh,
                     preferred_element_type=jnp.float32)      # [Bt*h, S, d_k]

    # ---- Re-assemble heads -> [Bt*S, D], single 2-D output projection. ----
    row_blocks = []
    for b in range(Bt):
        row_blocks.append(
            jnp.concatenate([ctx[b * h + i] for i in range(h)], axis=-1))  # [S, D]
    ctx_cat = (jnp.concatenate(row_blocks, axis=0) if Bt > 1
               else row_blocks[0])                            # [Bt*S, D]

    out = jnp.dot(ctx_cat, woT_ref[...],
                  preferred_element_type=jnp.float32) + bo_ref[...]
    o_ref[...] = out.astype(o_ref.dtype)


def _pick_batch_block(B, S):
    """Choose sequences-per-grid-step: amortize per-step overhead, keep >=2
    grid steps when possible (v7x megacore), respect the (8,128) block rule."""
    if B <= 2:
        bt = 1
    else:
        bt = 1
        for cand in (8, 4, 2):
            if B % cand == 0 and B // cand >= 2:
                bt = cand
                break
    # Block's second-minor dim (bt*S rows) must be a multiple of 8 or the full
    # array extent; fall back to one block covering everything otherwise.
    if (bt * S) % 8 != 0:
        bt = B
    return bt


def multi_headed_attention(query, key, value, params, *, h, batch_block=None):
    """query/key/value: [B, S, D].  params: dict of wq,bq,wk,bk,wv,bv,wo,bo."""
    B, S, D = query.shape
    assert key.shape == (B, S, D) and value.shape == (B, S, D)
    assert D % h == 0
    d_k = D // h

    if batch_block is None:
        batch_block = _pick_batch_block(B, S)
    assert B % batch_block == 0
    n_blocks = B // batch_block

    scale = 1.0 / math.sqrt(d_k)
    dt = query.dtype

    # Host-side (one-time, free) parameter prep:
    #   * transpose Linear weights so the kernel computes x @ W_T directly,
    #   * fold the attention scale into the Q projection weight + bias,
    #   * present biases as (1, D) slabs for clean 2-D VMEM broadcasting.
    wqT = (params["wq"].T * scale).astype(dt)
    wkT = params["wk"].T.astype(dt)
    wvT = params["wv"].T.astype(dt)
    woT = params["wo"].T.astype(dt)
    bq = (params["bq"] * scale).reshape(1, D).astype(dt)
    bk = params["bk"].reshape(1, D).astype(dt)
    bv = params["bv"].reshape(1, D).astype(dt)
    bo = params["bo"].reshape(1, D).astype(dt)

    # Flatten (B, S, D) -> (B*S, D) on the host (contiguous reshape, free) so
    # each grid step sees a plain 2-D row slab of `batch_block` sequences.
    q2 = query.reshape(B * S, D)
    k2 = key.reshape(B * S, D)
    v2 = value.reshape(B * S, D)

    rows_per_block = batch_block * S
    act_spec = pl.BlockSpec((rows_per_block, D), lambda b: (b, 0))
    w_spec = pl.BlockSpec((D, D), lambda b: (0, 0))
    b_spec = pl.BlockSpec((1, D), lambda b: (0, 0))

    kernel = functools.partial(_mha_kernel, h=h, d_k=d_k, seq_len=S,
                               batch_block=batch_block)

    out2 = pl.pallas_call(
        kernel,
        out_shape=jax.ShapeDtypeStruct((B * S, D), dt),
        grid=(n_blocks,),
        in_specs=[act_spec, act_spec, act_spec,
                  w_spec, b_spec, w_spec, b_spec, w_spec, b_spec,
                  w_spec, b_spec],
        out_specs=act_spec,
        compiler_params=pltpu.CompilerParams(
            dimension_semantics=("parallel",)),
    )(q2, k2, v2, wqT, bq, wkT, bk, wvT, bv, woT, bo)

    return out2.reshape(B, S, D)


def _reference_mha(query, key, value, params, *, h):
    """Plain-JAX reference mirroring the PyTorch forward (mask=None, eval)."""
    B, S, D = query.shape
    d_k = D // h

    def lin(x, w, b):
        return x @ w.T + b

    q = lin(query, params["wq"], params["bq"]).reshape(B, S, h, d_k).transpose(0, 2, 1, 3)
    k = lin(key, params["wk"], params["bk"]).reshape(B, S, h, d_k).transpose(0, 2, 1, 3)
    v = lin(value, params["wv"], params["bv"]).reshape(B, S, h, d_k).transpose(0, 2, 1, 3)

    scores = jnp.einsum("bhqd,bhkd->bhqk", q, k) / math.sqrt(d_k)
    probs = jax.nn.softmax(scores, axis=-1)
    ctx = jnp.einsum("bhqk,bhkd->bhqd", probs, v)
    ctx = ctx.transpose(0, 2, 1, 3).reshape(B, S, D)
    return lin(ctx, params["wo"], params["bo"])


if __name__ == "__main__":
    # Small shapes consistent with the module: h=8 heads, d_model=32 -> d_k=4.
    B, S, D, H = 2, 8, 32, 8

    root = jax.random.PRNGKey(0)
    keys = jax.random.split(root, 16)

    def init_linear(kw, kb, fan_in):
        bound = 1.0 / math.sqrt(fan_in)
        w = jax.random.uniform(kw, (D, D), jnp.float32, -bound, bound)
        b = jax.random.uniform(kb, (D,), jnp.float32, -bound, bound)
        return w, b

    wq, bq = init_linear(keys[0], keys[1], D)
    wk, bk = init_linear(keys[2], keys[3], D)
    wv, bv = init_linear(keys[4], keys[5], D)
    wo, bo = init_linear(keys[6], keys[7], D)
    params = dict(wq=wq, bq=bq, wk=wk, bk=bk, wv=wv, bv=bv, wo=wo, bo=bo)

    query = jax.random.normal(keys[8], (B, S, D), jnp.float32)
    key_ = jax.random.normal(keys[9], (B, S, D), jnp.float32)
    value = jax.random.normal(keys[10], (B, S, D), jnp.float32)

    out = multi_headed_attention(query, key_, value, params, h=H)
    out = jax.block_until_ready(out)

    ref = _reference_mha(query, key_, value, params, h=H)
    assert out.shape == (B, S, D)
    # Tolerance relaxed from 1e-4 to 1e-3 because the softmax denominator uses
    # the EUP approximate reciprocal (relative error ~1e-4).
    assert jnp.allclose(out, ref, rtol=1e-3, atol=1e-3), "mismatch vs reference"

    print("KERNEL_OK")
</pallas_src>

<mosaic_0001>
module attributes {stable_mosaic.version = 11 : i64} {
  func.func @_mha_kernel(%arg0: i32, %arg1: memref<8x32xf32, #tpu.memory_space<vmem>>, %arg2: memref<8x32xf32, #tpu.memory_space<vmem>>, %arg3: memref<8x32xf32, #tpu.memory_space<vmem>>, %arg4: memref<32x32xf32, #tpu.memory_space<vmem>>, %arg5: memref<1x32xf32, #tpu.memory_space<vmem>>, %arg6: memref<32x32xf32, #tpu.memory_space<vmem>>, %arg7: memref<1x32xf32, #tpu.memory_space<vmem>>, %arg8: memref<32x32xf32, #tpu.memory_space<vmem>>, %arg9: memref<1x32xf32, #tpu.memory_space<vmem>>, %arg10: memref<32x32xf32, #tpu.memory_space<vmem>>, %arg11: memref<1x32xf32, #tpu.memory_space<vmem>>, %arg12: memref<8x32xf32, #tpu.memory_space<vmem>>) attributes {dimension_semantics = [#tpu.dimension_semantics<parallel>], iteration_bounds = array<i64: 2>, scalar_prefetch = 0 : i64, scratch_operands = 0 : i64, tpu.core_type = #tpu.core_type<tc>, window_params = [{transform_indices = @transform_0, window_bounds = array<i64: 8, 32>}, {transform_indices = @transform_1, window_bounds = array<i64: 8, 32>}, {transform_indices = @transform_2, window_bounds = array<i64: 8, 32>}, {pipeline_mode = #tpu.pipeline_mode<synchronous>, transform_indices = @transform_3, window_bounds = array<i64: 32, 32>}, {pipeline_mode = #tpu.pipeline_mode<synchronous>, transform_indices = @transform_4, window_bounds = array<i64: 1, 32>}, {pipeline_mode = #tpu.pipeline_mode<synchronous>, transform_indices = @transform_5, window_bounds = array<i64: 32, 32>}, {pipeline_mode = #tpu.pipeline_mode<synchronous>, transform_indices = @transform_6, window_bounds = array<i64: 1, 32>}, {pipeline_mode = #tpu.pipeline_mode<synchronous>, transform_indices = @transform_7, window_bounds = array<i64: 32, 32>}, {pipeline_mode = #tpu.pipeline_mode<synchronous>, transform_indices = @transform_8, window_bounds = array<i64: 1, 32>}, {pipeline_mode = #tpu.pipeline_mode<synchronous>, transform_indices = @transform_9, window_bounds = array<i64: 32, 32>}, {pipeline_mode = #tpu.pipeline_mode<synchronous>, transform_indices = @transform_10, window_bounds = array<i64: 1, 32>}, {transform_indices = @transform_11, window_bounds = array<i64: 8, 32>}]} {
    %c0 = arith.constant 0 : index
    %c0_0 = arith.constant 0 : index
    %0 = vector.load %arg1[%c0, %c0_0] : memref<8x32xf32, #tpu.memory_space<vmem>>, vector<8x32xf32>
    %c0_1 = arith.constant 0 : index
    %c0_2 = arith.constant 0 : index
    %1 = vector.load %arg2[%c0_1, %c0_2] : memref<8x32xf32, #tpu.memory_space<vmem>>, vector<8x32xf32>
    %c0_3 = arith.constant 0 : index
    %c0_4 = arith.constant 0 : index
    %2 = vector.load %arg3[%c0_3, %c0_4] : memref<8x32xf32, #tpu.memory_space<vmem>>, vector<8x32xf32>
    %c0_5 = arith.constant 0 : index
    %c0_6 = arith.constant 0 : index
    %3 = vector.load %arg4[%c0_5, %c0_6] : memref<32x32xf32, #tpu.memory_space<vmem>>, vector<32x32xf32>
    %cst = arith.constant dense<0.000000e+00> : vector<8x32xf32>
    %4 = tpu.matmul %0, %3, %cst {dimension_numbers = #tpu.dot_dimension_numbers<[1], [0], [0], [1], [0, 0, 1, 1], [], []>} : vector<8x32xf32>, vector<32x32xf32>, vector<8x32xf32> -> vector<8x32xf32>
    %c0_7 = arith.constant 0 : index
    %c0_8 = arith.constant 0 : index
    %5 = vector.load %arg5[%c0_7, %c0_8] : memref<1x32xf32, #tpu.memory_space<vmem>>, vector<1x32xf32>
    %6 = vector.broadcast %5 : vector<1x32xf32> to vector<8x32xf32>
    %7 = arith.addf %4, %6 : vector<8x32xf32>
    %c0_9 = arith.constant 0 : index
    %c0_10 = arith.constant 0 : index
    %8 = vector.load %arg6[%c0_9, %c0_10] : memref<32x32xf32, #tpu.memory_space<vmem>>, vector<32x32xf32>
    %cst_11 = arith.constant dense<0.000000e+00> : vector<8x32xf32>
    %9 = tpu.matmul %1, %8, %cst_11 {dimension_numbers = #tpu.dot_dimension_numbers<[1], [0], [0], [1], [0, 0, 1, 1], [], []>} : vector<8x32xf32>, vector<32x32xf32>, vector<8x32xf32> -> vector<8x32xf32>
    %c0_12 = arith.constant 0 : index
    %c0_13 = arith.constant 0 : index
    %10 = vector.load %arg7[%c0_12, %c0_13] : memref<1x32xf32, #tpu.memory_space<vmem>>, vector<1x32xf32>
    %11 = vector.broadcast %10 : vector<1x32xf32> to vector<8x32xf32>
    %12 = arith.addf %9, %11 : vector<8x32xf32>
    %c0_14 = arith.constant 0 : index
    %c0_15 = arith.constant 0 : index
    %13 = vector.load %arg8[%c0_14, %c0_15] : memref<32x32xf32, #tpu.memory_space<vmem>>, vector<32x32xf32>
    %cst_16 = arith.constant dense<0.000000e+00> : vector<8x32xf32>
    %14 = tpu.matmul %2, %13, %cst_16 {dimension_numbers = #tpu.dot_dimension_numbers<[1], [0], [0], [1], [0, 0, 1, 1], [], []>} : vector<8x32xf32>, vector<32x32xf32>, vector<8x32xf32> -> vector<8x32xf32>
    %c0_17 = arith.constant 0 : index
    %c0_18 = arith.constant 0 : index
    %15 = vector.load %arg9[%c0_17, %c0_18] : memref<1x32xf32, #tpu.memory_space<vmem>>, vector<1x32xf32>
    %16 = vector.broadcast %15 : vector<1x32xf32> to vector<8x32xf32>
    %17 = arith.addf %14, %16 : vector<8x32xf32>
    %18 = vector.extract_strided_slice %7 {offsets = [0, 0], sizes = [8, 4], strides = [1, 1]} : vector<8x32xf32> to vector<8x4xf32>
    %19 = vector.extract_strided_slice %7 {offsets = [0, 4], sizes = [8, 4], strides = [1, 1]} : vector<8x32xf32> to vector<8x4xf32>
    %20 = vector.extract_strided_slice %7 {offsets = [0, 8], sizes = [8, 4], strides = [1, 1]} : vector<8x32xf32> to vector<8x4xf32>
    %21 = vector.extract_strided_slice %7 {offsets = [0, 12], sizes = [8, 4], strides = [1, 1]} : vector<8x32xf32> to vector<8x4xf32>
    %22 = vector.extract_strided_slice %7 {offsets = [0, 16], sizes = [8, 4], strides = [1, 1]} : vector<8x32xf32> to vector<8x4xf32>
    %23 = vector.extract_strided_slice %7 {offsets = [0, 20], sizes = [8, 4], strides = [1, 1]} : vector<8x32xf32> to vector<8x4xf32>
    %24 = vector.extract_strided_slice %7 {offsets = [0, 24], sizes = [8, 4], strides = [1, 1]} : vector<8x32xf32> to vector<8x4xf32>
    %25 = vector.extract_strided_slice %7 {offsets = [0, 28], sizes = [8, 4], strides = [1, 1]} : vector<8x32xf32> to vector<8x4xf32>
    %26 = vector.shape_cast %18 : vector<8x4xf32> to vector<1x8x4xf32>
    %27 = vector.shape_cast %19 : vector<8x4xf32> to vector<1x8x4xf32>
    %28 = vector.shape_cast %20 : vector<8x4xf32> to vector<1x8x4xf32>
    %29 = vector.shape_cast %21 : vector<8x4xf32> to vector<1x8x4xf32>
    %30 = vector.shape_cast %22 : vector<8x4xf32> to vector<1x8x4xf32>
    %31 = vector.shape_cast %23 : vector<8x4xf32> to vector<1x8x4xf32>
    %32 = vector.shape_cast %24 : vector<8x4xf32> to vector<1x8x4xf32>
    %33 = vector.shape_cast %25 : vector<8x4xf32> to vector<1x8x4xf32>
    %34 = tpu.concatenate %26, %27, %28, %29, %30, %31, %32, %33 in 0 : vector<1x8x4xf32>, vector<1x8x4xf32>, vector<1x8x4xf32>, vector<1x8x4xf32>, vector<1x8x4xf32>, vector<1x8x4xf32>, vector<1x8x4xf32>, vector<1x8x4xf32> -> vector<8x8x4xf32>
    %35 = vector.extract_strided_slice %12 {offsets = [0, 0], sizes = [8, 4], strides = [1, 1]} : vector<8x32xf32> to vector<8x4xf32>
    %36 = vector.extract_strided_slice %12 {offsets = [0, 4], sizes = [8, 4], strides = [1, 1]} : vector<8x32xf32> to vector<8x4xf32>
    %37 = vector.extract_strided_slice %12 {offsets = [0, 8], sizes = [8, 4], strides = [1, 1]} : vector<8x32xf32> to vector<8x4xf32>
    %38 = vector.extract_strided_slice %12 {offsets = [0, 12], sizes = [8, 4], strides = [1, 1]} : vector<8x32xf32> to vector<8x4xf32>
    %39 = vector.extract_strided_slice %12 {offsets = [0, 16], sizes = [8, 4], strides = [1, 1]} : vector<8x32xf32> to vector<8x4xf32>
    %40 = vector.extract_strided_slice %12 {offsets = [0, 20], sizes = [8, 4], strides = [1, 1]} : vector<8x32xf32> to vector<8x4xf32>
    %41 = vector.extract_strided_slice %12 {offsets = [0, 24], sizes = [8, 4], strides = [1, 1]} : vector<8x32xf32> to vector<8x4xf32>
    %42 = vector.extract_strided_slice %12 {offsets = [0, 28], sizes = [8, 4], strides = [1, 1]} : vector<8x32xf32> to vector<8x4xf32>
    %43 = vector.shape_cast %35 : vector<8x4xf32> to vector<1x8x4xf32>
    %44 = vector.shape_cast %36 : vector<8x4xf32> to vector<1x8x4xf32>
    %45 = vector.shape_cast %37 : vector<8x4xf32> to vector<1x8x4xf32>
    %46 = vector.shape_cast %38 : vector<8x4xf32> to vector<1x8x4xf32>
    %47 = vector.shape_cast %39 : vector<8x4xf32> to vector<1x8x4xf32>
    %48 = vector.shape_cast %40 : vector<8x4xf32> to vector<1x8x4xf32>
    %49 = vector.shape_cast %41 : vector<8x4xf32> to vector<1x8x4xf32>
    %50 = vector.shape_cast %42 : vector<8x4xf32> to vector<1x8x4xf32>
    %51 = tpu.concatenate %43, %44, %45, %46, %47, %48, %49, %50 in 0 : vector<1x8x4xf32>, vector<1x8x4xf32>, vector<1x8x4xf32>, vector<1x8x4xf32>, vector<1x8x4xf32>, vector<1x8x4xf32>, vector<1x8x4xf32>, vector<1x8x4xf32> -> vector<8x8x4xf32>
    %52 = vector.extract_strided_slice %17 {offsets = [0, 0], sizes = [8, 4], strides = [1, 1]} : vector<8x32xf32> to vector<8x4xf32>
    %53 = vector.extract_strided_slice %17 {offsets = [0, 4], sizes = [8, 4], strides = [1, 1]} : vector<8x32xf32> to vector<8x4xf32>
    %54 = vector.extract_strided_slice %17 {offsets = [0, 8], sizes = [8, 4], strides = [1, 1]} : vector<8x32xf32> to vector<8x4xf32>
    %55 = vector.extract_strided_slice %17 {offsets = [0, 12], sizes = [8, 4], strides = [1, 1]} : vector<8x32xf32> to vector<8x4xf32>
    %56 = vector.extract_strided_slice %17 {offsets = [0, 16], sizes = [8, 4], strides = [1, 1]} : vector<8x32xf32> to vector<8x4xf32>
    %57 = vector.extract_strided_slice %17 {offsets = [0, 20], sizes = [8, 4], strides = [1, 1]} : vector<8x32xf32> to vector<8x4xf32>
    %58 = vector.extract_strided_slice %17 {offsets = [0, 24], sizes = [8, 4], strides = [1, 1]} : vector<8x32xf32> to vector<8x4xf32>
    %59 = vector.extract_strided_slice %17 {offsets = [0, 28], sizes = [8, 4], strides = [1, 1]} : vector<8x32xf32> to vector<8x4xf32>
    %60 = vector.shape_cast %52 : vector<8x4xf32> to vector<1x8x4xf32>
    %61 = vector.shape_cast %53 : vector<8x4xf32> to vector<1x8x4xf32>
    %62 = vector.shape_cast %54 : vector<8x4xf32> to vector<1x8x4xf32>
    %63 = vector.shape_cast %55 : vector<8x4xf32> to vector<1x8x4xf32>
    %64 = vector.shape_cast %56 : vector<8x4xf32> to vector<1x8x4xf32>
    %65 = vector.shape_cast %57 : vector<8x4xf32> to vector<1x8x4xf32>
    %66 = vector.shape_cast %58 : vector<8x4xf32> to vector<1x8x4xf32>
    %67 = vector.shape_cast %59 : vector<8x4xf32> to vector<1x8x4xf32>
    %68 = tpu.concatenate %60, %61, %62, %63, %64, %65, %66, %67 in 0 : vector<1x8x4xf32>, vector<1x8x4xf32>, vector<1x8x4xf32>, vector<1x8x4xf32>, vector<1x8x4xf32>, vector<1x8x4xf32>, vector<1x8x4xf32>, vector<1x8x4xf32> -> vector<8x8x4xf32>
    "tpu.trace_start"() <{level = 10 : i32, message = "bqd,bkd->bqk"}> : () -> ()
    %cst_19 = arith.constant dense<0.000000e+00> : vector<8x8x8xf32>
    %69 = tpu.matmul %34, %51, %cst_19 {dimension_numbers = #tpu.dot_dimension_numbers<[2], [2], [1], [1], [0, 0, 0, 1, 1, 1], [0], [0]>} : vector<8x8x4xf32>, vector<8x8x4xf32>, vector<8x8x8xf32> -> vector<8x8x8xf32>
    "tpu.trace_stop"() : () -> ()
    %cst_20 = arith.constant dense<0xFF800000> : vector<8x8xf32>
    %70 = vector.multi_reduction <maximumf>, %69, %cst_20 [2] : vector<8x8x8xf32> to vector<8x8xf32>
    %71 = vector.shape_cast %70 : vector<8x8xf32> to vector<8x8x1xf32>
    %72 = vector.broadcast %71 : vector<8x8x1xf32> to vector<8x8x8xf32>
    %73 = arith.subf %69, %72 : vector<8x8x8xf32>
    %74 = math.exp %73 : vector<8x8x8xf32>
    %cst_21 = arith.constant dense<0.000000e+00> : vector<8x8xf32>
    %75 = vector.multi_reduction <add>, %74, %cst_21 [2] : vector<8x8x8xf32> to vector<8x8xf32>
    %76 = vector.shape_cast %75 : vector<8x8xf32> to vector<8x8x1xf32>
    %77 = tpu.reciprocal %76 {approx = true} : vector<8x8x1xf32> -> vector<8x8x1xf32>
    %78 = vector.broadcast %77 : vector<8x8x1xf32> to vector<8x8x8xf32>
    %79 = arith.mulf %74, %78 : vector<8x8x8xf32>
    "tpu.trace_start"() <{level = 10 : i32, message = "bqk,bkd->bqd"}> : () -> ()
    %cst_22 = arith.constant dense<0.000000e+00> : vector<8x8x4xf32>
    %80 = tpu.matmul %79, %68, %cst_22 {dimension_numbers = #tpu.dot_dimension_numbers<[2], [1], [1], [2], [0, 0, 0, 1, 1, 2], [0], [0]>} : vector<8x8x8xf32>, vector<8x8x4xf32>, vector<8x8x4xf32> -> vector<8x8x4xf32>
    "tpu.trace_stop"() : () -> ()
    %81 = vector.extract_strided_slice %80 {offsets = [0, 0, 0], sizes = [1, 8, 4], strides = [1, 1, 1]} : vector<8x8x4xf32> to vector<1x8x4xf32>
    %82 = vector.shape_cast %81 : vector<1x8x4xf32> to vector<8x4xf32>
    %83 = vector.extract_strided_slice %80 {offsets = [1, 0, 0], sizes = [1, 8, 4], strides = [1, 1, 1]} : vector<8x8x4xf32> to vector<1x8x4xf32>
    %84 = vector.shape_cast %83 : vector<1x8x4xf32> to vector<8x4xf32>
    %85 = vector.extract_strided_slice %80 {offsets = [2, 0, 0], sizes = [1, 8, 4], strides = [1, 1, 1]} : vector<8x8x4xf32> to vector<1x8x4xf32>
    %86 = vector.shape_cast %85 : vector<1x8x4xf32> to vector<8x4xf32>
    %87 = vector.extract_strided_slice %80 {offsets = [3, 0, 0], sizes = [1, 8, 4], strides = [1, 1, 1]} : vector<8x8x4xf32> to vector<1x8x4xf32>
    %88 = vector.shape_cast %87 : vector<1x8x4xf32> to vector<8x4xf32>
    %89 = vector.extract_strided_slice %80 {offsets = [4, 0, 0], sizes = [1, 8, 4], strides = [1, 1, 1]} : vector<8x8x4xf32> to vector<1x8x4xf32>
    %90 = vector.shape_cast %89 : vector<1x8x4xf32> to vector<8x4xf32>
    %91 = vector.extract_strided_slice %80 {offsets = [5, 0, 0], sizes = [1, 8, 4], strides = [1, 1, 1]} : vector<8x8x4xf32> to vector<1x8x4xf32>
    %92 = vector.shape_cast %91 : vector<1x8x4xf32> to vector<8x4xf32>
    %93 = vector.extract_strided_slice %80 {offsets = [6, 0, 0], sizes = [1, 8, 4], strides = [1, 1, 1]} : vector<8x8x4xf32> to vector<1x8x4xf32>
    %94 = vector.shape_cast %93 : vector<1x8x4xf32> to vector<8x4xf32>
    %95 = vector.extract_strided_slice %80 {offsets = [7, 0, 0], sizes = [1, 8, 4], strides = [1, 1, 1]} : vector<8x8x4xf32> to vector<1x8x4xf32>
    %96 = vector.shape_cast %95 : vector<1x8x4xf32> to vector<8x4xf32>
    %97 = tpu.concatenate %82, %84, %86, %88, %90, %92, %94, %96 in 1 : vector<8x4xf32>, vector<8x4xf32>, vector<8x4xf32>, vector<8x4xf32>, vector<8x4xf32>, vector<8x4xf32>, vector<8x4xf32>, vector<8x4xf32> -> vector<8x32xf32>
    %c0_23 = arith.constant 0 : index
    %c0_24 = arith.constant 0 : index
    %98 = vector.load %arg10[%c0_23, %c0_24] : memref<32x32xf32, #tpu.memory_space<vmem>>, vector<32x32xf32>
    %cst_25 = arith.constant dense<0.000000e+00> : vector<8x32xf32>
    %99 = tpu.matmul %97, %98, %cst_25 {dimension_numbers = #tpu.dot_dimension_numbers<[1], [0], [0], [1], [0, 0, 1, 1], [], []>} : vector<8x32xf32>, vector<32x32xf32>, vector<8x32xf32> -> vector<8x32xf32>
    %c0_26 = arith.constant 0 : index
    %c0_27 = arith.constant 0 : index
    %100 = vector.load %arg11[%c0_26, %c0_27] : memref<1x32xf32, #tpu.memory_space<vmem>>, vector<1x32xf32>
    %101 = vector.broadcast %100 : vector<1x32xf32> to vector<8x32xf32>
    %102 = arith.addf %99, %101 : vector<8x32xf32>
    %c0_28 = arith.constant 0 : index
    %c0_29 = arith.constant 0 : index
    %103 = vector.load %arg12[%c0_28, %c0_29] : memref<8x32xf32, #tpu.memory_space<vmem>>, vector<8x32xf32>
    tpu.vector_store %arg12[%c0_28, %c0_29], %102 {strides = array<i32>} : memref<8x32xf32, #tpu.memory_space<vmem>>, vector<8x32xf32>,
    return
  }
  func.func @transform_0(%arg0: i32) -> (i32, i32) {
    %c0_i32 = arith.constant 0 : i32
    %c0_i32_0 = arith.constant 0 : i32
    return %arg0, %c0_i32 : i32, i32
  }
  func.func @transform_1(%arg0: i32) -> (i32, i32) {
    %c0_i32 = arith.constant 0 : i32
    %c0_i32_0 = arith.constant 0 : i32
    return %arg0, %c0_i32 : i32, i32
  }
  func.func @transform_2(%arg0: i32) -> (i32, i32) {
    %c0_i32 = arith.constant 0 : i32
    %c0_i32_0 = arith.constant 0 : i32
    return %arg0, %c0_i32 : i32, i32
  }
  func.func @transform_3(%arg0: i32) -> (i32, i32) {
    %c0_i32 = arith.constant 0 : i32
    %c0_i32_0 = arith.constant 0 : i32
    %c0_i32_1 = arith.constant 0 : i32
    return %c0_i32, %c0_i32_0 : i32, i32
  }
  func.func @transform_4(%arg0: i32) -> (i32, i32) {
    %c0_i32 = arith.constant 0 : i32
    %c0_i32_0 = arith.constant 0 : i32
    %c0_i32_1 = arith.constant 0 : i32
    return %c0_i32, %c0_i32_0 : i32, i32
  }
  func.func @transform_5(%arg0: i32) -> (i32, i32) {
    %c0_i32 = arith.constant 0 : i32
    %c0_i32_0 = arith.constant 0 : i32
    %c0_i32_1 = arith.constant 0 : i32
    return %c0_i32, %c0_i32_0 : i32, i32
  }
  func.func @transform_6(%arg0: i32) -> (i32, i32) {
    %c0_i32 = arith.constant 0 : i32
    %c0_i32_0 = arith.constant 0 : i32
    %c0_i32_1 = arith.constant 0 : i32
    return %c0_i32, %c0_i32_0 : i32, i32
  }
  func.func @transform_7(%arg0: i32) -> (i32, i32) {
    %c0_i32 = arith.constant 0 : i32
    %c0_i32_0 = arith.constant 0 : i32
    %c0_i32_1 = arith.constant 0 : i32
    return %c0_i32, %c0_i32_0 : i32, i32
  }
  func.func @transform_8(%arg0: i32) -> (i32, i32) {
    %c0_i32 = arith.constant 0 : i32
    %c0_i32_0 = arith.constant 0 : i32
    %c0_i32_1 = arith.constant 0 : i32
    return %c0_i32, %c0_i32_0 : i32, i32
  }
  func.func @transform_9(%arg0: i32) -> (i32, i32) {
    %c0_i32 = arith.constant 0 : i32
    %c0_i32_0 = arith.constant 0 : i32
    %c0_i32_1 = arith.constant 0 : i32
    return %c0_i32, %c0_i32_0 : i32, i32
  }
  func.func @transform_10(%arg0: i32) -> (i32, i32) {
    %c0_i32 = arith.constant 0 : i32
    %c0_i32_0 = arith.constant 0 : i32
    %c0_i32_1 = arith.constant 0 : i32
    return %c0_i32, %c0_i32_0 : i32, i32
  }
  func.func @transform_11(%arg0: i32) -> (i32, i32) {
    %c0_i32 = arith.constant 0 : i32
    %c0_i32_0 = arith.constant 0 : i32
    return %arg0, %c0_i32 : i32, i32
  }
}

</mosaic_0001>

<llo_original>
// kernel: tpu_custom_call.1
$region0: #{tpu_custom_call.1}
  #allocation0 [shape = 'u32[]', space=smem, size = 0x4, offset = 0x4, fixed_abs, tag = 'smem constant byte address 0x4 - core index']
  #allocation1 [shape = 'u32[72,128]{1,0:T(1,128)}', space=vmem, size = 0x9000, scoped, tag = 'internal scratch']
  %s0 = inlined_call_operand.hbm [shape: f32[16,32], index: 0, kind: input, shape index: {}]
  %s1 = inlined_call_operand.hbm [shape: f32[16,32], index: 1, kind: input, shape index: {}]
  %s2 = inlined_call_operand.hbm [shape: f32[16,32], index: 2, kind: input, shape index: {}]
  %s3 = inlined_call_operand.hbm [shape: f32[32,32], index: 3, kind: input, shape index: {}]
  %s4 = inlined_call_operand.vmem [shape: f32[1,32], index: 4, kind: input, shape index: {}]
  %s5 = inlined_call_operand.hbm [shape: f32[32,32], index: 5, kind: input, shape index: {}]
  %s6 = inlined_call_operand.vmem [shape: f32[1,32], index: 6, kind: input, shape index: {}]
  %s7 = inlined_call_operand.hbm [shape: f32[32,32], index: 7, kind: input, shape index: {}]
  %s8 = inlined_call_operand.vmem [shape: f32[1,32], index: 8, kind: input, shape index: {}]
  %s9 = inlined_call_operand.hbm [shape: f32[32,32], index: 9, kind: input, shape index: {}]
  %s10 = inlined_call_operand.vmem [shape: f32[1,32], index: 10, kind: input, shape index: {}]
  %s11 = inlined_call_operand.hbm [shape: f32[16,32], index: 11, kind: output, shape index: {}]
  %s12 = sld [smem:[#allocation0]]
  $region105: #{tpu_custom_call.1} parent=0
    _
  %s14 = ssub.s32 1, %s12
  %s15 = scalar_select 0, %s14, %s12
  $region1: #{tpu_custom_call.1} parent=0
    #allocation2 [shape = 'u8[8192]{0}', space=vmem, size = 0x2000, scoped, tag = 'input window, operand 0']
    #allocation3 [shape = 's32[2]{0}', space=sflag, size = 0x8, scoped, tag = 'scoped memory for tpu_custom_call.1']
    #allocation4 [shape = 's32[2]{0}', space=sflag, size = 0x8, scoped, tag = 'scoped memory for tpu_custom_call.1']
    #allocation5 [shape = 'u8[8192]{0}', space=vmem, size = 0x2000, scoped, tag = 'input window, operand 1']
    #allocation6 [shape = 's32[2]{0}', space=sflag, size = 0x8, scoped, tag = 'scoped memory for tpu_custom_call.1']
    #allocation7 [shape = 'u8[8192]{0}', space=vmem, size = 0x2000, scoped, tag = 'input window, operand 2']
    #allocation8 [shape = 'u8[16384]{0}', space=vmem, size = 0x4000, scoped, tag = 'input window, operand 3, single buffered']
    #allocation9 [shape = 's32[1]{0}', space=sflag, size = 0x4, scoped, tag = 'scoped memory for tpu_custom_call.1']
    #allocation10 [shape = 'u8[16384]{0}', space=vmem, size = 0x4000, scoped, tag = 'input window, operand 5, single buffered']
    #allocation11 [shape = 'u8[16384]{0}', space=vmem, size = 0x4000, scoped, tag = 'input window, operand 7, single buffered']
    #allocation12 [shape = 's32[1]{0}', space=sflag, size = 0x4, scoped, tag = 'scoped memory for tpu_custom_call.1']
    #allocation13 [shape = 'u8[16384]{0}', space=vmem, size = 0x4000, scoped, tag = 'input window, operand 9, single buffered']
    #allocation14 [shape = 'u8[8192]{0}', space=vmem, size = 0x2000, scoped, tag = 'output window, operand 0']
    %16 = vsyncpa [#allocation3], 0
    %s17 = scalar_lea.sflag [#allocation3], 1
    %18 = vsyncpa %s17, 0
    %19 = vsyncpa [#allocation6], 0
    %s20 = scalar_lea.sflag [#allocation6], 1
    %21 = vsyncpa %s20, 0
    %22 = vsyncpa [#allocation9], 0
    %23 = vsyncpa [#allocation12], 0
    %24 = vsyncpa [#allocation4], 0
    %s25 = scalar_lea.sflag [#allocation4], 1
    %26 = vsyncpa %s25, 0
    loop: start=0, step=1, limit=4
    $region2: #{tpu_custom_call.1} parent=1 // loop_pre_header
      _
    $region3: #{tpu_custom_call.1} parent=1 // loop_header
      %s28 = sphi 0, %s32
      %p29 = scmp.ge.s32.totalorder %s28, 4
      %s38 = sphi 0, %s40
      %s41 = sphi 0, %s38
      %s42 = sphi 0, %s41
      %s58 = sphi 0, %s42
      %s64 = sphi 0, %s66
      %s67 = sphi 0, %s64
      %s68 = sphi 0, %s67
      %s84 = sphi 0, %s68
      %s90 = sphi 0, %s92
      %s93 = sphi 0, %s90
      %s94 = sphi 0, %s93
      %s110 = sphi 0, %s94
      %s114 = sphi 0, %s114
      %s116 = sphi 0, %s114
      %s117 = sphi 0, %s116
      %s131 = sphi 0, %s117
      %s135 = sphi 0, %s135
      %s137 = sphi 0, %s135
      %s138 = sphi 0, %s137
      %s152 = sphi 0, %s138
      %s156 = sphi 0, %s156
      %s158 = sphi 0, %s156
      %s159 = sphi 0, %s158
      %s173 = sphi 0, %s159
      %s177 = sphi 0, %s177
      %s179 = sphi 0, %s177
      %s180 = sphi 0, %s179
      %s194 = sphi 0, %s180
      %s198 = sphi 0, %s198
      %s200 = sphi 0, %s198
      %s201 = sphi 0, %s200
      %s215 = sphi 0, %s201
      %s219 = sphi 0, %s219
      %s221 = sphi 0, %s219
      %s222 = sphi 0, %s221
      %s236 = sphi 0, %s222
      %s240 = sphi 0, %s240
      %s242 = sphi 0, %s240
      %s243 = sphi 0, %s242
      %s257 = sphi 0, %s243
      %s261 = sphi 0, %s261
      %s263 = sphi 0, %s261
      %s264 = sphi 0, %s263
      %s278 = sphi 0, %s264
      %s284 = sphi 0, %s286
      %s287 = sphi 0, %s284
      %s288 = sphi 0, %s287
      %s304 = sphi 0, %s288
    $region4: #{tpu_custom_call.1} parent=1 // loop_header_branch
      %31 = sbr.rel (%p29) target = $region8
    $region5: #{tpu_custom_call.1} parent=1 // loop_body
      %s33 = ssub.s32 %s28, 1
      %s34 = ssub.s32 %s28, 2
      %s35 = sadd.s32 %s28, 1
      %s36 = ssub.s32 %s28, %s35
      %p37 = scmp.eq.s32.totalorder %s36, 0
      %s39 = sadd.s32 %s38, 1
      %s40 = scalar_select %p37, %s38, %s39
      %p43 = pneg %p37
      %p44 = scmp.eq.s32.totalorder %s28, 1
      %p45 = por %p43, %p44
      %p46 = scmp.ne.s32.totalorder %s38, %s41
      %p47 = scmp.eq.s32.totalorder %s28, 0
      %p48 = por %p46, %p47
      %p49 = scmp.ne.s32.totalorder %s38, %s41
      %p50 = scmp.eq.s32.totalorder %s33, 1
      %p51 = por %p49, %p50
      %p52 = scmp.ne.s32.totalorder %s41, %s42
      %p53 = scmp.eq.s32.totalorder %s33, 0
      %p54 = por %p52, %p53
      %p55 = scmp.ne.s32.totalorder %s41, %s42
      %p56 = scmp.eq.s32.totalorder %s34, 1
      %p57 = por %p55, %p56
      %p59 = scmp.ne.s32.totalorder %s42, %s58
      %p60 = scmp.eq.s32.totalorder %s34, 0
      %p61 = por %p59, %p60
      %s62 = ssub.s32 %s28, %s35
      %p63 = scmp.eq.s32.totalorder %s62, 0
      %s65 = sadd.s32 %s64, 1
      %s66 = scalar_select %p63, %s64, %s65
      %p69 = pneg %p63
      %p70 = scmp.eq.s32.totalorder %s28, 1
      %p71 = por %p69, %p70
      %p72 = scmp.ne.s32.totalorder %s64, %s67
      %p73 = scmp.eq.s32.totalorder %s28, 0
      %p74 = por %p72, %p73
      %p75 = scmp.ne.s32.totalorder %s64, %s67
      %p76 = scmp.eq.s32.totalorder %s33, 1
      %p77 = por %p75, %p76
      %p78 = scmp.ne.s32.totalorder %s67, %s68
      %p79 = scmp.eq.s32.totalorder %s33, 0
      %p80 = por %p78, %p79
      %p81 = scmp.ne.s32.totalorder %s67, %s68
      %p82 = scmp.eq.s32.totalorder %s34, 1
      %p83 = por %p81, %p82
      %p85 = scmp.ne.s32.totalorder %s68, %s84
      %p86 = scmp.eq.s32.totalorder %s34, 0
      %p87 = por %p85, %p86
      %s88 = ssub.s32 %s28, %s35
      %p89 = scmp.eq.s32.totalorder %s88, 0
      %s91 = sadd.s32 %s90, 1
      %s92 = scalar_select %p89, %s90, %s91
      %p95 = pneg %p89
      %p96 = scmp.eq.s32.totalorder %s28, 1
      %p97 = por %p95, %p96
      %p98 = scmp.ne.s32.totalorder %s90, %s93
      %p99 = scmp.eq.s32.totalorder %s28, 0
      %p100 = por %p98, %p99
      %p101 = scmp.ne.s32.totalorder %s90, %s93
      %p102 = scmp.eq.s32.totalorder %s33, 1
      %p103 = por %p101, %p102
      %p104 = scmp.ne.s32.totalorder %s93, %s94
      %p105 = scmp.eq.s32.totalorder %s33, 0
      %p106 = por %p104, %p105
      %p107 = scmp.ne.s32.totalorder %s93, %s94
      %p108 = scmp.eq.s32.totalorder %s34, 1
      %p109 = por %p107, %p108
      %p111 = scmp.ne.s32.totalorder %s94, %s110
      %p112 = scmp.eq.s32.totalorder %s34, 0
      %p113 = por %p111, %p112
      %s115 = sadd.s32 %s114, 1
      %p118 = scmp.eq.s32.totalorder %s28, 1
      %p119 = scmp.ne.s32.totalorder %s114, %s116
      %p120 = scmp.eq.s32.totalorder %s28, 0
      %p121 = por %p119, %p120
      %p122 = scmp.ne.s32.totalorder %s114, %s116
      %p123 = scmp.eq.s32.totalorder %s33, 1
      %p124 = por %p122, %p123
      %p125 = scmp.ne.s32.totalorder %s116, %s117
      %p126 = scmp.eq.s32.totalorder %s33, 0
      %p127 = por %p125, %p126
      %p128 = scmp.ne.s32.totalorder %s116, %s117
      %p129 = scmp.eq.s32.totalorder %s34, 1
      %p130 = por %p128, %p129
      %p132 = scmp.ne.s32.totalorder %s117, %s131
      %p133 = scmp.eq.s32.totalorder %s34, 0
      %p134 = por %p132, %p133
      %s136 = sadd.s32 %s135, 1
      %p139 = scmp.eq.s32.totalorder %s28, 1
      %p140 = scmp.ne.s32.totalorder %s135, %s137
      %p141 = scmp.eq.s32.totalorder %s28, 0
      %p142 = por %p140, %p141
      %p143 = scmp.ne.s32.totalorder %s135, %s137
      %p144 = scmp.eq.s32.totalorder %s33, 1
      %p145 = por %p143, %p144
      %p146 = scmp.ne.s32.totalorder %s137, %s138
      %p147 = scmp.eq.s32.totalorder %s33, 0
      %p148 = por %p146, %p147
      %p149 = scmp.ne.s32.totalorder %s137, %s138
      %p150 = scmp.eq.s32.totalorder %s34, 1
      %p151 = por %p149, %p150
      %p153 = scmp.ne.s32.totalorder %s138, %s152
      %p154 = scmp.eq.s32.totalorder %s34, 0
      %p155 = por %p153, %p154
      %s157 = sadd.s32 %s156, 1
      %p160 = scmp.eq.s32.totalorder %s28, 1
      %p161 = scmp.ne.s32.totalorder %s156, %s158
      %p162 = scmp.eq.s32.totalorder %s28, 0
      %p163 = por %p161, %p162
      %p164 = scmp.ne.s32.totalorder %s156, %s158
      %p165 = scmp.eq.s32.totalorder %s33, 1
      %p166 = por %p164, %p165
      %p167 = scmp.ne.s32.totalorder %s158, %s159
      %p168 = scmp.eq.s32.totalorder %s33, 0
      %p169 = por %p167, %p168
      %p170 = scmp.ne.s32.totalorder %s158, %s159
      %p171 = scmp.eq.s32.totalorder %s34, 1
      %p172 = por %p170, %p171
      %p174 = scmp.ne.s32.totalorder %s159, %s173
      %p175 = scmp.eq.s32.totalorder %s34, 0
      %p176 = por %p174, %p175
      %s178 = sadd.s32 %s177, 1
      %p181 = scmp.eq.s32.totalorder %s28, 1
      %p182 = scmp.ne.s32.totalorder %s177, %s179
      %p183 = scmp.eq.s32.totalorder %s28, 0
      %p184 = por %p182, %p183
      %p185 = scmp.ne.s32.totalorder %s177, %s179
      %p186 = scmp.eq.s32.totalorder %s33, 1
      %p187 = por %p185, %p186
      %p188 = scmp.ne.s32.totalorder %s179, %s180
      %p189 = scmp.eq.s32.totalorder %s33, 0
      %p190 = por %p188, %p189
      %p191 = scmp.ne.s32.totalorder %s179, %s180
      %p192 = scmp.eq.s32.totalorder %s34, 1
      %p193 = por %p191, %p192
      %p195 = scmp.ne.s32.totalorder %s180, %s194
      %p196 = scmp.eq.s32.totalorder %s34, 0
      %p197 = por %p195, %p196
      %s199 = sadd.s32 %s198, 1
      %p202 = scmp.eq.s32.totalorder %s28, 1
      %p203 = scmp.ne.s32.totalorder %s198, %s200
      %p204 = scmp.eq.s32.totalorder %s28, 0
      %p205 = por %p203, %p204
      %p206 = scmp.ne.s32.totalorder %s198, %s200
      %p207 = scmp.eq.s32.totalorder %s33, 1
      %p208 = por %p206, %p207
      %p209 = scmp.ne.s32.totalorder %s200, %s201
      %p210 = scmp.eq.s32.totalorder %s33, 0
      %p211 = por %p209, %p210
      %p212 = scmp.ne.s32.totalorder %s200, %s201
      %p213 = scmp.eq.s32.totalorder %s34, 1
      %p214 = por %p212, %p213
      %p216 = scmp.ne.s32.totalorder %s201, %s215
      %p217 = scmp.eq.s32.totalorder %s34, 0
      %p218 = por %p216, %p217
      %s220 = sadd.s32 %s219, 1
      %p223 = scmp.eq.s32.totalorder %s28, 1
      %p224 = scmp.ne.s32.totalorder %s219, %s221
      %p225 = scmp.eq.s32.totalorder %s28, 0
      %p226 = por %p224, %p225
      %p227 = scmp.ne.s32.totalorder %s219, %s221
      %p228 = scmp.eq.s32.totalorder %s33, 1
      %p229 = por %p227, %p228
      %p230 = scmp.ne.s32.totalorder %s221, %s222
      %p231 = scmp.eq.s32.totalorder %s33, 0
      %p232 = por %p230, %p231
      %p233 = scmp.ne.s32.totalorder %s221, %s222
      %p234 = scmp.eq.s32.totalorder %s34, 1
      %p235 = por %p233, %p234
      %p237 = scmp.ne.s32.totalorder %s222, %s236
      %p238 = scmp.eq.s32.totalorder %s34, 0
      %p239 = por %p237, %p238
      %s241 = sadd.s32 %s240, 1
      %p244 = scmp.eq.s32.totalorder %s28, 1
      %p245 = scmp.ne.s32.totalorder %s240, %s242
      %p246 = scmp.eq.s32.totalorder %s28, 0
      %p247 = por %p245, %p246
      %p248 = scmp.ne.s32.totalorder %s240, %s242
      %p249 = scmp.eq.s32.totalorder %s33, 1
      %p250 = por %p248, %p249
      %p251 = scmp.ne.s32.totalorder %s242, %s243
      %p252 = scmp.eq.s32.totalorder %s33, 0
      %p253 = por %p251, %p252
      %p254 = scmp.ne.s32.totalorder %s242, %s243
      %p255 = scmp.eq.s32.totalorder %s34, 1
      %p256 = por %p254, %p255
      %p258 = scmp.ne.s32.totalorder %s243, %s257
      %p259 = scmp.eq.s32.totalorder %s34, 0
      %p260 = por %p258, %p259
      %s262 = sadd.s32 %s261, 1
      %p265 = scmp.eq.s32.totalorder %s28, 1
      %p266 = scmp.ne.s32.totalorder %s261, %s263
      %p267 = scmp.eq.s32.totalorder %s28, 0
      %p268 = por %p266, %p267
      %p269 = scmp.ne.s32.totalorder %s261, %s263
      %p270 = scmp.eq.s32.totalorder %s33, 1
      %p271 = por %p269, %p270
      %p272 = scmp.ne.s32.totalorder %s263, %s264
      %p273 = scmp.eq.s32.totalorder %s33, 0
      %p274 = por %p272, %p273
      %p275 = scmp.ne.s32.totalorder %s263, %s264
      %p276 = scmp.eq.s32.totalorder %s34, 1
      %p277 = por %p275, %p276
      %p279 = scmp.ne.s32.totalorder %s264, %s278
      %p280 = scmp.eq.s32.totalorder %s34, 0
      %p281 = por %p279, %p280
      %s282 = ssub.s32 %s28, %s35
      %p283 = scmp.eq.s32.totalorder %s282, 0
      %s285 = sadd.s32 %s284, 1
      %s286 = scalar_select %p283, %s284, %s285
      %p289 = pneg %p283
      %p290 = scmp.eq.s32.totalorder %s28, 1
      %p291 = por %p289, %p290
      %p292 = scmp.ne.s32.totalorder %s284, %s287
      %p293 = scmp.eq.s32.totalorder %s28, 0
      %p294 = por %p292, %p293
      %p295 = scmp.ne.s32.totalorder %s284, %s287
      %p296 = scmp.eq.s32.totalorder %s33, 1
      %p297 = por %p295, %p296
      %p298 = scmp.ne.s32.totalorder %s287, %s288
      %p299 = scmp.eq.s32.totalorder %s33, 0
      %p300 = por %p298, %p299
      %p301 = scmp.ne.s32.totalorder %s287, %s288
      %p302 = scmp.eq.s32.totalorder %s34, 1
      %p303 = por %p301, %p302
      %p305 = scmp.ne.s32.totalorder %s288, %s304
      %p306 = scmp.eq.s32.totalorder %s34, 0
      %p307 = por %p305, %p306
      %p308 = scmp.le.s32.totalorder 1, %s28
      %p309 = scmp.lt.s32.totalorder %s28, 3
      %p310 = pnand %p308, %p309
      %p311 = pneg %p310
      // Predicated region
      $region9: #{tpu_custom_call.1} parent=5 // pred_check
        _
      $region10: #{tpu_custom_call.1} parent=5 // pred_check_branch
        %313 = sbr.rel (%p310) target = $region12
      $region11: #{tpu_custom_call.1} parent=5 // pred_region
        %s314 = ssub.s32 %s28, 1
        // Predicated region
        $region13: #{tpu_custom_call.1} parent=11 // pred_check
          %p315 = pneg %p127
        $region14: #{tpu_custom_call.1} parent=11 // pred_check_branch
          %317 = sbr.rel (%p315) target = $region16
        $region15: #{tpu_custom_call.1} parent=11 // pred_region
          %319 = vsyncadd [#allocation9], 0
          %s320 = sshll.u32 %s3, 4
          %s321 = int_to_ptr.hbm [resolvable:$true] %s320
          %s322 = sshll.u32 [#allocation8], 4
          %s323 = int_to_ptr.vmem [resolvable:$true] %s322
          %328 = dma.hbm_to_vmem [thread:$0]  %s321, 512, %s323, [#allocation9], 128, 128, 8
        $region16: #{tpu_custom_call.1} parent=11 // pred_fallthru
          _
        // Predicated region
        $region17: #{tpu_custom_call.1} parent=11 // pred_check
          %p329 = pneg %p148
        $region18: #{tpu_custom_call.1} parent=11 // pred_check_branch
          %331 = sbr.rel (%p329) target = $region20
        $region19: #{tpu_custom_call.1} parent=11 // pred_region
          _
        $region20: #{tpu_custom_call.1} parent=11 // pred_fallthru
          _
        // Predicated region
        $region21: #{tpu_custom_call.1} parent=11 // pred_check
          %p332 = pneg %p169
        $region22: #{tpu_custom_call.1} parent=11 // pred_check_branch
          %334 = sbr.rel (%p332) target = $region24
        $region23: #{tpu_custom_call.1} parent=11 // pred_region
          %336 = vsyncadd [#allocation9], 0
          %s337 = sshll.u32 %s5, 4
          %s338 = int_to_ptr.hbm [resolvable:$true] %s337
          %s339 = sshll.u32 [#allocation10], 4
          %s340 = int_to_ptr.vmem [resolvable:$true] %s339
          %345 = dma.hbm_to_vmem [thread:$0]  %s338, 512, %s340, [#allocation9], 128, 128, 8
        $region24: #{tpu_custom_call.1} parent=11 // pred_fallthru
          _
        // Predicated region
        $region25: #{tpu_custom_call.1} parent=11 // pred_check
          %p346 = pneg %p190
        $region26: #{tpu_custom_call.1} parent=11 // pred_check_branch
          %348 = sbr.rel (%p346) target = $region28
        $region27: #{tpu_custom_call.1} parent=11 // pred_region
          _
        $region28: #{tpu_custom_call.1} parent=11 // pred_fallthru
          _
        // Predicated region
        $region29: #{tpu_custom_call.1} parent=11 // pred_check
          %p349 = pneg %p211
        $region30: #{tpu_custom_call.1} parent=11 // pred_check_branch
          %351 = sbr.rel (%p349) target = $region32
        $region31: #{tpu_custom_call.1} parent=11 // pred_region
          %353 = vsyncadd [#allocation12], 0
          %s354 = sshll.u32 %s7, 4
          %s355 = int_to_ptr.hbm [resolvable:$true] %s354
          %s356 = sshll.u32 [#allocation11], 4
          %s357 = int_to_ptr.vmem [resolvable:$true] %s356
          %362 = dma.hbm_to_vmem [thread:$0]  %s355, 512, %s357, [#allocation12], 128, 128, 8
        $region32: #{tpu_custom_call.1} parent=11 // pred_fallthru
          _
        // Predicated region
        $region33: #{tpu_custom_call.1} parent=11 // pred_check
          %p363 = pneg %p232
        $region34: #{tpu_custom_call.1} parent=11 // pred_check_branch
          %365 = sbr.rel (%p363) target = $region36
        $region35: #{tpu_custom_call.1} parent=11 // pred_region
          _
        $region36: #{tpu_custom_call.1} parent=11 // pred_fallthru
          _
        // Predicated region
        $region37: #{tpu_custom_call.1} parent=11 // pred_check
          %p366 = pneg %p253
        $region38: #{tpu_custom_call.1} parent=11 // pred_check_branch
          %368 = sbr.rel (%p366) target = $region40
        $region39: #{tpu_custom_call.1} parent=11 // pred_region
          %370 = vsyncadd [#allocation12], 0
          %s371 = sshll.u32 %s9, 4
          %s372 = int_to_ptr.hbm [resolvable:$true] %s371
          %s373 = sshll.u32 [#allocation13], 4
          %s374 = int_to_ptr.vmem [resolvable:$true] %s373
          %379 = dma.hbm_to_vmem [thread:$0]  %s372, 512, %s374, [#allocation12], 128, 128, 8
        $region40: #{tpu_custom_call.1} parent=11 // pred_fallthru
          _
        // Predicated region
        $region41: #{tpu_custom_call.1} parent=11 // pred_check
          %p380 = pneg %p274
        $region42: #{tpu_custom_call.1} parent=11 // pred_check_branch
          %382 = sbr.rel (%p380) target = $region44
        $region43: #{tpu_custom_call.1} parent=11 // pred_region
          _
        $region44: #{tpu_custom_call.1} parent=11 // pred_fallthru
          _
      $region12: #{tpu_custom_call.1} parent=5 // pred_fallthru
        _
      %p383 = scmp.lt.s32.totalorder %s28, 2
      // Predicated region
      $region45: #{tpu_custom_call.1} parent=5 // pred_check
        %p384 = pneg %p383
      $region46: #{tpu_custom_call.1} parent=5 // pred_check_branch
        %386 = sbr.rel (%p384) target = $region48
      $region47: #{tpu_custom_call.1} parent=5 // pred_region
        // Predicated region
        $region49: #{tpu_custom_call.1} parent=47 // pred_check
          %p387 = pneg %p48
        $region50: #{tpu_custom_call.1} parent=47 // pred_check_branch
          %389 = sbr.rel (%p387) target = $region52
        $region51: #{tpu_custom_call.1} parent=47 // pred_region
          %s390 = sand.u32 %s38, 1
          %s391 = scalar_lea.sflag [#allocation3], %s390
          %s392 = sand.u32 %s38, 1
          %s393 = smul.addr %s392, 8
          %s394 = scalar_lea.vmem [#allocation2], %s393
          %396 = vsyncadd %s391, 0
          %s397 = smul.addr %s28, 8
          %s398 = scalar_lea.hbm %s0, %s397
          %s400 = sshll.u32 %s398, 4
          %s401 = int_to_ptr.hbm [resolvable:$true] %s400
          %s402 = sshll.u32 %s394, 4
          %s403 = int_to_ptr.vmem [resolvable:$true] %s402
          %405 = dma.hbm_to_vmem [thread:$0]  %s401, 128, %s403, %s391
        $region52: #{tpu_custom_call.1} parent=47 // pred_fallthru
          _
        // Predicated region
        $region53: #{tpu_custom_call.1} parent=47 // pred_check
          %p406 = pneg %p74
        $region54: #{tpu_custom_call.1} parent=47 // pred_check_branch
          %408 = sbr.rel (%p406) target = $region56
        $region55: #{tpu_custom_call.1} parent=47 // pred_region
          %s409 = sand.u32 %s28, 1
          %s410 = scalar_lea.sflag [#allocation6], %s409
          %s411 = sand.u32 %s64, 1
          %s412 = smul.addr %s411, 8
          %s413 = scalar_lea.vmem [#allocation5], %s412
          %415 = vsyncadd %s410, 0
          %s416 = smul.addr %s28, 8
          %s417 = scalar_lea.hbm %s1, %s416
          %s419 = sshll.u32 %s417, 4
          %s420 = int_to_ptr.hbm [resolvable:$true] %s419
          %s421 = sshll.u32 %s413, 4
          %s422 = int_to_ptr.vmem [resolvable:$true] %s421
          %424 = dma.hbm_to_vmem [thread:$0]  %s420, 128, %s422, %s410
        $region56: #{tpu_custom_call.1} parent=47 // pred_fallthru
          _
        // Predicated region
        $region57: #{tpu_custom_call.1} parent=47 // pred_check
          %p425 = pneg %p100
        $region58: #{tpu_custom_call.1} parent=47 // pred_check_branch
          %427 = sbr.rel (%p425) target = $region60
        $region59: #{tpu_custom_call.1} parent=47 // pred_region
          %s428 = sand.u32 %s28, 1
          %s429 = scalar_lea.sflag [#allocation6], %s428
          %s430 = sand.u32 %s90, 1
          %s431 = smul.addr %s430, 8
          %s432 = scalar_lea.vmem [#allocation7], %s431
          %434 = vsyncadd %s429, 0
          %s435 = smul.addr %s28, 8
          %s436 = scalar_lea.hbm %s2, %s435
          %s438 = sshll.u32 %s436, 4
          %s439 = int_to_ptr.hbm [resolvable:$true] %s438
          %s440 = sshll.u32 %s432, 4
          %s441 = int_to_ptr.vmem [resolvable:$true] %s440
          %443 = dma.hbm_to_vmem [thread:$0]  %s439, 128, %s441, %s429
        $region60: #{tpu_custom_call.1} parent=47 // pred_fallthru
          _
      $region48: #{tpu_custom_call.1} parent=5 // pred_fallthru
        _
      %p444 = scmp.le.s32.totalorder 1, %s28
      %p445 = scmp.lt.s32.totalorder %s28, 3
      %p446 = pnand %p444, %p445
      %p447 = pneg %p446
      // Predicated region
      $region61: #{tpu_custom_call.1} parent=5 // pred_check
        _
      $region62: #{tpu_custom_call.1} parent=5 // pred_check_branch
        %449 = sbr.rel (%p446) target = $region64
      $region63: #{tpu_custom_call.1} parent=5 // pred_region
        %s450 = ssub.s32 %s28, 1
        %s451 = sand.u32 %s41, 1
        %s452 = scalar_lea.sflag [#allocation3], %s451
        %s453 = sand.u32 %s41, 1
        %s454 = smul.addr %s453, 8
        %s455 = scalar_lea.vmem [#allocation2], %s454
        // Predicated region
        $region65: #{tpu_custom_call.1} parent=63 // pred_check
          %p456 = pneg %p54
        $region66: #{tpu_custom_call.1} parent=63 // pred_check_branch
          %458 = sbr.rel (%p456) target = $region68
        $region67: #{tpu_custom_call.1} parent=63 // pred_region
          %460 = dma.done %s452, 128
        $region68: #{tpu_custom_call.1} parent=63 // pred_fallthru
          _
        %s461 = sand.u32 %s33, 1
        %s462 = scalar_lea.sflag [#allocation6], %s461
        %s463 = sand.u32 %s67, 1
        %s464 = smul.addr %s463, 8
        %s465 = scalar_lea.vmem [#allocation5], %s464
        // Predicated region
        $region69: #{tpu_custom_call.1} parent=63 // pred_check
          %p466 = pneg %p80
        $region70: #{tpu_custom_call.1} parent=63 // pred_check_branch
          %468 = sbr.rel (%p466) target = $region72
        $region71: #{tpu_custom_call.1} parent=63 // pred_region
          %470 = dma.done %s462, 128
        $region72: #{tpu_custom_call.1} parent=63 // pred_fallthru
          _
        %s471 = sand.u32 %s33, 1
        %s472 = scalar_lea.sflag [#allocation6], %s471
        %s473 = sand.u32 %s93, 1
        %s474 = smul.addr %s473, 8
        %s475 = scalar_lea.vmem [#allocation7], %s474
        // Predicated region
        $region73: #{tpu_custom_call.1} parent=63 // pred_check
          %p476 = pneg %p106
        $region74: #{tpu_custom_call.1} parent=63 // pred_check_branch
          %478 = sbr.rel (%p476) target = $region76
        $region75: #{tpu_custom_call.1} parent=63 // pred_region
          %480 = dma.done %s472, 128
        $region76: #{tpu_custom_call.1} parent=63 // pred_fallthru
          _
        // Predicated region
        $region77: #{tpu_custom_call.1} parent=63 // pred_check
          %p481 = pneg %p127
        $region78: #{tpu_custom_call.1} parent=63 // pred_check_branch
          %483 = sbr.rel (%p481) target = $region80
        $region79: #{tpu_custom_call.1} parent=63 // pred_region
          %485 = dma.done [#allocation9], 512
        $region80: #{tpu_custom_call.1} parent=63 // pred_fallthru
          _
        // Predicated region
        $region81: #{tpu_custom_call.1} parent=63 // pred_check
          %p486 = pneg %p169
        $region82: #{tpu_custom_call.1} parent=63 // pred_check_branch
          %488 = sbr.rel (%p486) target = $region84
        $region83: #{tpu_custom_call.1} parent=63 // pred_region
          %490 = dma.done [#allocation9], 512
        $region84: #{tpu_custom_call.1} parent=63 // pred_fallthru
          _
        // Predicated region
        $region85: #{tpu_custom_call.1} parent=63 // pred_check
          %p491 = pneg %p211
        $region86: #{tpu_custom_call.1} parent=63 // pred_check_branch
          %493 = sbr.rel (%p491) target = $region88
        $region87: #{tpu_custom_call.1} parent=63 // pred_region
          %495 = dma.done [#allocation12], 512
        $region88: #{tpu_custom_call.1} parent=63 // pred_fallthru
          _
        // Predicated region
        $region89: #{tpu_custom_call.1} parent=63 // pred_check
          %p496 = pneg %p253
        $region90: #{tpu_custom_call.1} parent=63 // pred_check_branch
          %498 = sbr.rel (%p496) target = $region92
        $region91: #{tpu_custom_call.1} parent=63 // pred_region
          %500 = dma.done [#allocation12], 512
        $region92: #{tpu_custom_call.1} parent=63 // pred_fallthru
          _
        %s501 = sand.u32 %s41, 1
        %s502 = scalar_lea.sflag [#allocation3], %s501
        %s503 = sand.u32 %s41, 1
        %s504 = smul.addr %s503, 8
        %s505 = scalar_lea.vmem [#allocation2], %s504
        %p506 = pneg %p54
        %p507 = pneg %p51
        %s508 = sand.u32 %s33, 1
        %s509 = scalar_lea.sflag [#allocation6], %s508
        %s510 = sand.u32 %s67, 1
        %s511 = smul.addr %s510, 8
        %s512 = scalar_lea.vmem [#allocation5], %s511
        %p513 = pneg %p80
        %p514 = pneg %p77
        %s515 = sand.u32 %s33, 1
        %s516 = scalar_lea.sflag [#allocation6], %s515
        %s517 = sand.u32 %s93, 1
        %s518 = smul.addr %s517, 8
        %s519 = scalar_lea.vmem [#allocation7], %s518
        %p520 = pneg %p106
        %p521 = pneg %p103
        %p522 = pneg %p127
        %p523 = pneg %p124
        %p524 = pneg %p148
        %p525 = pneg %p145
        %p526 = pneg %p169
        %p527 = pneg %p166
        %p528 = pneg %p190
        %p529 = pneg %p187
        %p530 = pneg %p211
        %p531 = pneg %p208
        %p532 = pneg %p232
        %p533 = pneg %p229
        %p534 = pneg %p253
        %p535 = pneg %p250
        %p536 = pneg %p274
        %p537 = pneg %p271
        %p538 = pneg %p300
        %p539 = pneg %p297
        %s540 = sand.u32 %s287, 1
        %s541 = scalar_lea.sflag [#allocation4], %s540
        %s542 = sand.u32 %s287, 1
        %s543 = smul.addr %s542, 8
        %s544 = scalar_lea.vmem [#allocation14], %s543
        %v545 = vld [vmem:[%s455] sm:$0xff]
        %v546 = vld [vmem:[%s465] sm:$0xff]
        %v547 = vld [vmem:[%s475] sm:$0xff]
        %v548 = vld [vmem:[#allocation8] sm:$0xff]
        %v549 = vld [vmem:[#allocation8 + $0x8] sm:$0xff]
        %v550 = vld [vmem:[#allocation8 + $0x10] sm:$0xff]
        %v551 = vld [vmem:[#allocation8 + $0x18] sm:$0xff]
        %v552 = vld [vmem:[%s4] sm:$0x1]
        %v554 = vperm.slane %v552, 0
        %vm556 = vcmask 261120
        %v558 = vsel %vm556, %v545, 0
        %560 = vmatpush.msra.mxu0 0.0
        %561 = vmatpush.msra.mxu0 0.0
        %562 = vmatpush.msra.mxu0 0.0
        %563 = vmatpush.msra.mxu0 0.0
        %564 = vmatpush.msra.mxu0 0.0
        %565 = vmatpush.msra.mxu0 0.0
        %566 = vmatpush.msra.mxu0 0.0
        %567 = vmatpush.msra.mxu0 0.0
        %568 = vmatpush.msra.mxu0 0.0
        %569 = vmatpush.msra.mxu0 0.0
        %570 = vmatpush.msra.mxu0 0.0
        %571 = vmatpush.msra.mxu0 0.0
        %572 = vmatpush.msra.mxu0 %v551
        %573 = vmatpush.msra.mxu0 %v550
        %574 = vmatpush.msra.mxu0 %v549
        %575 = vmatpush.msra.mxu0 %v548
        %576 = vmatmul.f32.gmra.mxu0 %v558
        %v577 = vpop.f32.mrf.mxu0
        %v578 = vadd.f32 %v554, %v577
        %579 = vdwg.mxu0
        %v580 = vld [vmem:[#allocation10] sm:$0xff]
        %v581 = vld [vmem:[#allocation10 + $0x8] sm:$0xff]
        %v582 = vld [vmem:[#allocation10 + $0x10] sm:$0xff]
        %v583 = vld [vmem:[#allocation10 + $0x18] sm:$0xff]
        %v584 = vld [vmem:[%s6] sm:$0x1]
        %v586 = vperm.slane %v584, 0
        %v589 = vsel %vm556, %v546, 0
        %591 = vmatpush.msra.mxu0 0.0
        %592 = vmatpush.msra.mxu0 0.0
        %593 = vmatpush.msra.mxu0 0.0
        %594 = vmatpush.msra.mxu0 0.0
        %595 = vmatpush.msra.mxu0 0.0
        %596 = vmatpush.msra.mxu0 0.0
        %597 = vmatpush.msra.mxu0 0.0
        %598 = vmatpush.msra.mxu0 0.0
        %599 = vmatpush.msra.mxu0 0.0
        %600 = vmatpush.msra.mxu0 0.0
        %601 = vmatpush.msra.mxu0 0.0
        %602 = vmatpush.msra.mxu0 0.0
        %603 = vmatpush.msra.mxu0 %v583
        %604 = vmatpush.msra.mxu0 %v582
        %605 = vmatpush.msra.mxu0 %v581
        %606 = vmatpush.msra.mxu0 %v580
        %607 = vmatmul.f32.gmra.mxu0 %v589
        %v608 = vpop.f32.mrf.mxu0
        %v609 = vadd.f32 %v586, %v608
        %610 = vdwg.mxu0
        %v611 = vld [vmem:[#allocation11] sm:$0xff]
        %v612 = vld [vmem:[#allocation11 + $0x8] sm:$0xff]
        %v613 = vld [vmem:[#allocation11 + $0x10] sm:$0xff]
        %v614 = vld [vmem:[#allocation11 + $0x18] sm:$0xff]
        %v615 = vld [vmem:[%s8] sm:$0x1]
        %v617 = vperm.slane %v615, 0
        %v620 = vsel %vm556, %v547, 0
        %622 = vmatpush.msra.mxu0 0.0
        %623 = vmatpush.msra.mxu0 0.0
        %624 = vmatpush.msra.mxu0 0.0
        %625 = vmatpush.msra.mxu0 0.0
        %626 = vmatpush.msra.mxu0 0.0
        %627 = vmatpush.msra.mxu0 0.0
        %628 = vmatpush.msra.mxu0 0.0
        %629 = vmatpush.msra.mxu0 0.0
        %630 = vmatpush.msra.mxu0 0.0
        %631 = vmatpush.msra.mxu0 0.0
        %632 = vmatpush.msra.mxu0 0.0
        %633 = vmatpush.msra.mxu0 0.0
        %634 = vmatpush.msra.mxu0 %v614
        %635 = vmatpush.msra.mxu0 %v613
        %636 = vmatpush.msra.mxu0 %v612
        %637 = vmatpush.msra.mxu0 %v611
        %638 = vmatmul.f32.gmra.mxu0 %v620
        %v639 = vpop.f32.mrf.mxu0
        %v640 = vadd.f32 %v617, %v639
        %641 = vdwg.mxu0
        %643 = vrot.lane.b32.xlu0 %v578, 124
        %v644 = vpop.permute.xlu0 %643
        %645 = vrot.lane.b32.xlu0 %v578, 120
        %v646 = vpop.permute.xlu0 %645
        %647 = vrot.lane.b32.xlu0 %v578, 116
        %v648 = vpop.permute.xlu0 %647
        %649 = vrot.lane.b32.xlu0 %v578, 112
        %v650 = vpop.permute.xlu0 %649
        %651 = vrot.lane.b32.xlu0 %v578, 108
        %v652 = vpop.permute.xlu0 %651
        %653 = vrot.lane.b32.xlu0 %v578, 104
        %v654 = vpop.permute.xlu0 %653
        %655 = vrot.lane.b32.xlu0 %v578, 100
        %v656 = vpop.permute.xlu0 %655
        %658 = vrot.lane.b32.xlu0 %v609, 124
        %v659 = vpop.permute.xlu0 %658
        %660 = vrot.lane.b32.xlu0 %v609, 120
        %v661 = vpop.permute.xlu0 %660
        %662 = vrot.lane.b32.xlu0 %v609, 116
        %v663 = vpop.permute.xlu0 %662
        %664 = vrot.lane.b32.xlu0 %v609, 112
        %v665 = vpop.permute.xlu0 %664
        %666 = vrot.lane.b32.xlu0 %v609, 108
        %v667 = vpop.permute.xlu0 %666
        %668 = vrot.lane.b32.xlu0 %v609, 104
        %v669 = vpop.permute.xlu0 %668
        %670 = vrot.lane.b32.xlu0 %v609, 100
        %v671 = vpop.permute.xlu0 %670
        %673 = vrot.lane.b32.xlu0 %v640, 124
        %v674 = vpop.permute.xlu0 %673
        %676 = vrot.lane.b32.xlu0 %v640, 120
        %v677 = vpop.permute.xlu0 %676
        %679 = vrot.lane.b32.xlu0 %v640, 116
        %v680 = vpop.permute.xlu0 %679
        %682 = vrot.lane.b32.xlu0 %v640, 112
        %v683 = vpop.permute.xlu0 %682
        %685 = vrot.lane.b32.xlu0 %v640, 108
        %v686 = vpop.permute.xlu0 %685
        %688 = vrot.lane.b32.xlu0 %v640, 104
        %v689 = vpop.permute.xlu0 %688
        %691 = vrot.lane.b32.xlu0 %v640, 100
        %v692 = vpop.permute.xlu0 %691
        %vm694 = vcmask 31744
        %v695 = vsel %vm694, %v578, 0
        %v697 = vsel %vm694, %v609, 0
        %699 = vmatpush.xpose.msra.mxu0 0.0
        %700 = vmatpush.xpose.msra.mxu0 0.0
        %701 = vmatpush.xpose.msra.mxu0 0.0
        %702 = vmatpush.xpose.msra.mxu0 0.0
        %703 = vmatpush.xpose.msra.mxu0 0.0
        %704 = vmatpush.xpose.msra.mxu0 0.0
        %705 = vmatpush.xpose.msra.mxu0 0.0
        %706 = vmatpush.xpose.msra.mxu0 0.0
        %707 = vmatpush.xpose.msra.mxu0 0.0
        %708 = vmatpush.xpose.msra.mxu0 0.0
        %709 = vmatpush.xpose.msra.mxu0 0.0
        %710 = vmatpush.xpose.msra.mxu0 0.0
        %711 = vmatpush.xpose.msra.mxu0 0.0
        %712 = vmatpush.xpose.msra.mxu0 0.0
        %713 = vmatpush.xpose.msra.mxu0 0.0
        %714 = vmatpush.xpose.msra.mxu0 %v697
        %715 = vmatmul.f32.gmra.mxu0 %v695
        %v716 = vpop.f32.mrf.mxu0
        %v717 = vadd.f32 0.0, %v716
        %718 = vdwg.mxu0
        %v719 = vsel %vm694, %v644, 0
        %v721 = vsel %vm694, %v659, 0
        %723 = vmatpush.xpose.msra.mxu0 0.0
        %724 = vmatpush.xpose.msra.mxu0 0.0
        %725 = vmatpush.xpose.msra.mxu0 0.0
        %726 = vmatpush.xpose.msra.mxu0 0.0
        %727 = vmatpush.xpose.msra.mxu0 0.0
        %728 = vmatpush.xpose.msra.mxu0 0.0
        %729 = vmatpush.xpose.msra.mxu0 0.0
        %730 = vmatpush.xpose.msra.mxu0 0.0
        %731 = vmatpush.xpose.msra.mxu0 0.0
        %732 = vmatpush.xpose.msra.mxu0 0.0
        %733 = vmatpush.xpose.msra.mxu0 0.0
        %734 = vmatpush.xpose.msra.mxu0 0.0
        %735 = vmatpush.xpose.msra.mxu0 0.0
        %736 = vmatpush.xpose.msra.mxu0 0.0
        %737 = vmatpush.xpose.msra.mxu0 0.0
        %738 = vmatpush.xpose.msra.mxu0 %v721
        %739 = vmatmul.f32.gmra.mxu0 %v719
        %v740 = vpop.f32.mrf.mxu0
        %v741 = vadd.f32 0.0, %v740
        %742 = vdwg.mxu0
        %v743 = vsel %vm694, %v646, 0
        %v745 = vsel %vm694, %v661, 0
        %747 = vmatpush.xpose.msra.mxu0 0.0
        %748 = vmatpush.xpose.msra.mxu0 0.0
        %749 = vmatpush.xpose.msra.mxu0 0.0
        %750 = vmatpush.xpose.msra.mxu0 0.0
        %751 = vmatpush.xpose.msra.mxu0 0.0
        %752 = vmatpush.xpose.msra.mxu0 0.0
        %753 = vmatpush.xpose.msra.mxu0 0.0
        %754 = vmatpush.xpose.msra.mxu0 0.0
        %755 = vmatpush.xpose.msra.mxu0 0.0
        %756 = vmatpush.xpose.msra.mxu0 0.0
        %757 = vmatpush.xpose.msra.mxu0 0.0
        %758 = vmatpush.xpose.msra.mxu0 0.0
        %759 = vmatpush.xpose.msra.mxu0 0.0
        %760 = vmatpush.xpose.msra.mxu0 0.0
        %761 = vmatpush.xpose.msra.mxu0 0.0
        %762 = vmatpush.xpose.msra.mxu0 %v745
        %763 = vmatmul.f32.gmra.mxu0 %v743
        %v764 = vpop.f32.mrf.mxu0
        %v765 = vadd.f32 0.0, %v764
        %766 = vdwg.mxu0
        %v767 = vsel %vm694, %v648, 0
        %v769 = vsel %vm694, %v663, 0
        %771 = vmatpush.xpose.msra.mxu0 0.0
        %772 = vmatpush.xpose.msra.mxu0 0.0
        %773 = vmatpush.xpose.msra.mxu0 0.0
        %774 = vmatpush.xpose.msra.mxu0 0.0
        %775 = vmatpush.xpose.msra.mxu0 0.0
        %776 = vmatpush.xpose.msra.mxu0 0.0
        %777 = vmatpush.xpose.msra.mxu0 0.0
        %778 = vmatpush.xpose.msra.mxu0 0.0
        %779 = vmatpush.xpose.msra.mxu0 0.0
        %780 = vmatpush.xpose.msra.mxu0 0.0
        %781 = vmatpush.xpose.msra.mxu0 0.0
        %782 = vmatpush.xpose.msra.mxu0 0.0
        %783 = vmatpush.xpose.msra.mxu0 0.0
        %784 = vmatpush.xpose.msra.mxu0 0.0
        %785 = vmatpush.xpose.msra.mxu0 0.0
        %786 = vmatpush.xpose.msra.mxu0 %v769
        %787 = vmatmul.f32.gmra.mxu0 %v767
        %v788 = vpop.f32.mrf.mxu0
        %v789 = vadd.f32 0.0, %v788
        %790 = vdwg.mxu0
        %v791 = vsel %vm694, %v650, 0
        %v793 = vsel %vm694, %v665, 0
        %795 = vmatpush.xpose.msra.mxu0 0.0
        %796 = vmatpush.xpose.msra.mxu0 0.0
        %797 = vmatpush.xpose.msra.mxu0 0.0
        %798 = vmatpush.xpose.msra.mxu0 0.0
        %799 = vmatpush.xpose.msra.mxu0 0.0
        %800 = vmatpush.xpose.msra.mxu0 0.0
        %801 = vmatpush.xpose.msra.mxu0 0.0
        %802 = vmatpush.xpose.msra.mxu0 0.0
        %803 = vmatpush.xpose.msra.mxu0 0.0
        %804 = vmatpush.xpose.msra.mxu0 0.0
        %805 = vmatpush.xpose.msra.mxu0 0.0
        %806 = vmatpush.xpose.msra.mxu0 0.0
        %807 = vmatpush.xpose.msra.mxu0 0.0
        %808 = vmatpush.xpose.msra.mxu0 0.0
        %809 = vmatpush.xpose.msra.mxu0 0.0
        %810 = vmatpush.xpose.msra.mxu0 %v793
        %811 = vmatmul.f32.gmra.mxu0 %v791
        %v812 = vpop.f32.mrf.mxu0
        %v813 = vadd.f32 0.0, %v812
        %814 = vdwg.mxu0
        %v815 = vsel %vm694, %v652, 0
        %v817 = vsel %vm694, %v667, 0
        %819 = vmatpush.xpose.msra.mxu0 0.0
        %820 = vmatpush.xpose.msra.mxu0 0.0
        %821 = vmatpush.xpose.msra.mxu0 0.0
        %822 = vmatpush.xpose.msra.mxu0 0.0
        %823 = vmatpush.xpose.msra.mxu0 0.0
        %824 = vmatpush.xpose.msra.mxu0 0.0
        %825 = vmatpush.xpose.msra.mxu0 0.0
        %826 = vmatpush.xpose.msra.mxu0 0.0
        %827 = vmatpush.xpose.msra.mxu0 0.0
        %828 = vmatpush.xpose.msra.mxu0 0.0
        %829 = vmatpush.xpose.msra.mxu0 0.0
        %830 = vmatpush.xpose.msra.mxu0 0.0
        %831 = vmatpush.xpose.msra.mxu0 0.0
        %832 = vmatpush.xpose.msra.mxu0 0.0
        %833 = vmatpush.xpose.msra.mxu0 0.0
        %834 = vmatpush.xpose.msra.mxu0 %v817
        %835 = vmatmul.f32.gmra.mxu0 %v815
        %v836 = vpop.f32.mrf.mxu0
        %v837 = vadd.f32 0.0, %v836
        %838 = vdwg.mxu0
        %v839 = vsel %vm694, %v654, 0
        %v841 = vsel %vm694, %v669, 0
        %843 = vmatpush.xpose.msra.mxu0 0.0
        %844 = vmatpush.xpose.msra.mxu0 0.0
        %845 = vmatpush.xpose.msra.mxu0 0.0
        %846 = vmatpush.xpose.msra.mxu0 0.0
        %847 = vmatpush.xpose.msra.mxu0 0.0
        %848 = vmatpush.xpose.msra.mxu0 0.0
        %849 = vmatpush.xpose.msra.mxu0 0.0
        %850 = vmatpush.xpose.msra.mxu0 0.0
        %851 = vmatpush.xpose.msra.mxu0 0.0
        %852 = vmatpush.xpose.msra.mxu0 0.0
        %853 = vmatpush.xpose.msra.mxu0 0.0
        %854 = vmatpush.xpose.msra.mxu0 0.0
        %855 = vmatpush.xpose.msra.mxu0 0.0
        %856 = vmatpush.xpose.msra.mxu0 0.0
        %857 = vmatpush.xpose.msra.mxu0 0.0
        %858 = vmatpush.xpose.msra.mxu0 %v841
        %859 = vmatmul.f32.gmra.mxu0 %v839
        %v860 = vpop.f32.mrf.mxu0
        %v861 = vadd.f32 0.0, %v860
        %862 = vdwg.mxu0
        %v863 = vsel %vm694, %v656, 0
        %v865 = vsel %vm694, %v671, 0
        %867 = vmatpush.xpose.msra.mxu0 0.0
        %868 = vmatpush.xpose.msra.mxu0 0.0
        %869 = vmatpush.xpose.msra.mxu0 0.0
        %870 = vmatpush.xpose.msra.mxu0 0.0
        %871 = vmatpush.xpose.msra.mxu0 0.0
        %872 = vmatpush.xpose.msra.mxu0 0.0
        %873 = vmatpush.xpose.msra.mxu0 0.0
        %874 = vmatpush.xpose.msra.mxu0 0.0
        %875 = vmatpush.xpose.msra.mxu0 0.0
        %876 = vmatpush.xpose.msra.mxu0 0.0
        %877 = vmatpush.xpose.msra.mxu0 0.0
        %878 = vmatpush.xpose.msra.mxu0 0.0
        %879 = vmatpush.xpose.msra.mxu0 0.0
        %880 = vmatpush.xpose.msra.mxu0 0.0
        %881 = vmatpush.xpose.msra.mxu0 0.0
        %882 = vmatpush.xpose.msra.mxu0 %v865
        %883 = vmatmul.f32.gmra.mxu0 %v863
        %v884 = vpop.f32.mrf.mxu0
        %v885 = vadd.f32 0.0, %v884
        %886 = vdwg.mxu0
        %vm887 = vcmask 64512
        %v888 = vsel %vm887, %v717, -inf
        %889 = vmax.xlane.f32.xlu0 %v888
        %v890 = vpop.xlane.xlu0 %889
        %v891 = vsel %vm887, %v741, -inf
        %892 = vmax.xlane.f32.xlu0 %v891
        %v893 = vpop.xlane.xlu0 %892
        %v894 = vsel %vm887, %v765, -inf
        %895 = vmax.xlane.f32.xlu0 %v894
        %v896 = vpop.xlane.xlu0 %895
        %v897 = vsel %vm887, %v789, -inf
        %898 = vmax.xlane.f32.xlu0 %v897
        %v899 = vpop.xlane.xlu0 %898
        %v900 = vsel %vm887, %v813, -inf
        %901 = vmax.xlane.f32.xlu0 %v900
        %v902 = vpop.xlane.xlu0 %901
        %v903 = vsel %vm887, %v837, -inf
        %904 = vmax.xlane.f32.xlu0 %v903
        %v905 = vpop.xlane.xlu0 %904
        %v906 = vsel %vm887, %v861, -inf
        %907 = vmax.xlane.f32.xlu0 %v906
        %v908 = vpop.xlane.xlu0 %907
        %v909 = vsel %vm887, %v885, -inf
        %910 = vmax.xlane.f32.xlu0 %v909
        %v911 = vpop.xlane.xlu0 %910
        %v912 = vsub.f32 %v717, %v890
        %v913 = vsub.f32 %v741, %v893
        %v914 = vsub.f32 %v765, %v896
        %v915 = vsub.f32 %v789, %v899
        %v916 = vsub.f32 %v813, %v902
        %v917 = vsub.f32 %v837, %v905
        %v918 = vsub.f32 %v861, %v908
        %v919 = vsub.f32 %v885, %v911
        %v920 = vmul.f32 %v912, 1.442695
        %v921 = vpow.pop %v920
        %v922 = vmul.f32 %v913, 1.442695
        %v923 = vpow.pop %v922
        %v924 = vmul.f32 %v914, 1.442695
        %v925 = vpow.pop %v924
        %v926 = vmul.f32 %v915, 1.442695
        %v927 = vpow.pop %v926
        %v928 = vmul.f32 %v916, 1.442695
        %v929 = vpow.pop %v928
        %v930 = vmul.f32 %v917, 1.442695
        %v931 = vpow.pop %v930
        %v932 = vmul.f32 %v918, 1.442695
        %v933 = vpow.pop %v932
        %v934 = vmul.f32 %v919, 1.442695
        %v935 = vpow.pop %v934
        %v936 = vsel %vm887, %v921, 0.0
        %937 = vadd.xlane.f32.xlu0 %v936
        %v938 = vpop.xlane.xlu0 %937
        %v939 = vsel %vm887, %v923, 0.0
        %940 = vadd.xlane.f32.xlu0 %v939
        %v941 = vpop.xlane.xlu0 %940
        %v942 = vsel %vm887, %v925, 0.0
        %943 = vadd.xlane.f32.xlu0 %v942
        %v944 = vpop.xlane.xlu0 %943
        %v945 = vsel %vm887, %v927, 0.0
        %946 = vadd.xlane.f32.xlu0 %v945
        %v947 = vpop.xlane.xlu0 %946
        %v948 = vsel %vm887, %v929, 0.0
        %949 = vadd.xlane.f32.xlu0 %v948
        %v950 = vpop.xlane.xlu0 %949
        %v951 = vsel %vm887, %v931, 0.0
        %952 = vadd.xlane.f32.xlu0 %v951
        %v953 = vpop.xlane.xlu0 %952
        %v954 = vsel %vm887, %v933, 0.0
        %955 = vadd.xlane.f32.xlu0 %v954
        %v956 = vpop.xlane.xlu0 %955
        %v957 = vsel %vm887, %v935, 0.0
        %958 = vadd.xlane.f32.xlu0 %v957
        %v959 = vpop.xlane.xlu0 %958
        %v960 = vrcp.pop %v938
        %v961 = vrcp.pop %v941
        %v962 = vrcp.pop %v944
        %v963 = vrcp.pop %v947
        %v964 = vrcp.pop %v950
        %v965 = vrcp.pop %v953
        %v966 = vrcp.pop %v956
        %v967 = vrcp.pop %v959
        %v968 = vmul.f32 %v921, %v960
        %v969 = vmul.f32 %v923, %v961
        %v970 = vmul.f32 %v925, %v962
        %v971 = vmul.f32 %v927, %v963
        %v972 = vmul.f32 %v929, %v964
        %v973 = vmul.f32 %v931, %v965
        %v974 = vmul.f32 %v933, %v966
        %v975 = vmul.f32 %v935, %v967
        %v977 = vsel %vm887, %v968, 0
        %979 = vmatpush.msra.mxu0 0.0
        %980 = vmatpush.msra.mxu0 0.0
        %981 = vmatpush.msra.mxu0 0.0
        %982 = vmatpush.msra.mxu0 0.0
        %983 = vmatpush.msra.mxu0 0.0
        %984 = vmatpush.msra.mxu0 0.0
        %985 = vmatpush.msra.mxu0 0.0
        %986 = vmatpush.msra.mxu0 0.0
        %987 = vmatpush.msra.mxu0 0.0
        %988 = vmatpush.msra.mxu0 0.0
        %989 = vmatpush.msra.mxu0 0.0
        %990 = vmatpush.msra.mxu0 0.0
        %991 = vmatpush.msra.mxu0 0.0
        %992 = vmatpush.msra.mxu0 0.0
        %993 = vmatpush.msra.mxu0 0.0
        %994 = vmatpush.msra.mxu0 %v640
        %995 = vmatmul.f32.gmra.mxu0 %v977
        %v996 = vpop.f32.mrf.mxu0
        %v997 = vadd.f32 0.0, %v996
        %998 = vdwg.mxu0
        %v1000 = vsel %vm887, %v969, 0
        %1002 = vmatpush.msra.mxu0 0.0
        %1003 = vmatpush.msra.mxu0 0.0
        %1004 = vmatpush.msra.mxu0 0.0
        %1005 = vmatpush.msra.mxu0 0.0
        %1006 = vmatpush.msra.mxu0 0.0
        %1007 = vmatpush.msra.mxu0 0.0
        %1008 = vmatpush.msra.mxu0 0.0
        %1009 = vmatpush.msra.mxu0 0.0
        %1010 = vmatpush.msra.mxu0 0.0
        %1011 = vmatpush.msra.mxu0 0.0
        %1012 = vmatpush.msra.mxu0 0.0
        %1013 = vmatpush.msra.mxu0 0.0
        %1014 = vmatpush.msra.mxu0 0.0
        %1015 = vmatpush.msra.mxu0 0.0
        %1016 = vmatpush.msra.mxu0 0.0
        %1017 = vmatpush.msra.mxu0 %v674
        %1018 = vmatmul.f32.gmra.mxu0 %v1000
        %v1019 = vpop.f32.mrf.mxu0
        %v1020 = vadd.f32 0.0, %v1019
        %1021 = vdwg.mxu0
        %v1023 = vsel %vm887, %v970, 0
        %1025 = vmatpush.msra.mxu0 0.0
        %1026 = vmatpush.msra.mxu0 0.0
        %1027 = vmatpush.msra.mxu0 0.0
        %1028 = vmatpush.msra.mxu0 0.0
        %1029 = vmatpush.msra.mxu0 0.0
        %1030 = vmatpush.msra.mxu0 0.0
        %1031 = vmatpush.msra.mxu0 0.0
        %1032 = vmatpush.msra.mxu0 0.0
        %1033 = vmatpush.msra.mxu0 0.0
        %1034 = vmatpush.msra.mxu0 0.0
        %1035 = vmatpush.msra.mxu0 0.0
        %1036 = vmatpush.msra.mxu0 0.0
        %1037 = vmatpush.msra.mxu0 0.0
        %1038 = vmatpush.msra.mxu0 0.0
        %1039 = vmatpush.msra.mxu0 0.0
        %1040 = vmatpush.msra.mxu0 %v677
        %1041 = vmatmul.f32.gmra.mxu0 %v1023
        %v1042 = vpop.f32.mrf.mxu0
        %v1043 = vadd.f32 0.0, %v1042
        %1044 = vdwg.mxu0
        %v1046 = vsel %vm887, %v971, 0
        %1048 = vmatpush.msra.mxu0 0.0
        %1049 = vmatpush.msra.mxu0 0.0
        %1050 = vmatpush.msra.mxu0 0.0
        %1051 = vmatpush.msra.mxu0 0.0
        %1052 = vmatpush.msra.mxu0 0.0
        %1053 = vmatpush.msra.mxu0 0.0
        %1054 = vmatpush.msra.mxu0 0.0
        %1055 = vmatpush.msra.mxu0 0.0
        %1056 = vmatpush.msra.mxu0 0.0
        %1057 = vmatpush.msra.mxu0 0.0
        %1058 = vmatpush.msra.mxu0 0.0
        %1059 = vmatpush.msra.mxu0 0.0
        %1060 = vmatpush.msra.mxu0 0.0
        %1061 = vmatpush.msra.mxu0 0.0
        %1062 = vmatpush.msra.mxu0 0.0
        %1063 = vmatpush.msra.mxu0 %v680
        %1064 = vmatmul.f32.gmra.mxu0 %v1046
        %v1065 = vpop.f32.mrf.mxu0
        %v1066 = vadd.f32 0.0, %v1065
        %1067 = vdwg.mxu0
        %v1069 = vsel %vm887, %v972, 0
        %1071 = vmatpush.msra.mxu0 0.0
        %1072 = vmatpush.msra.mxu0 0.0
        %1073 = vmatpush.msra.mxu0 0.0
        %1074 = vmatpush.msra.mxu0 0.0
        %1075 = vmatpush.msra.mxu0 0.0
        %1076 = vmatpush.msra.mxu0 0.0
        %1077 = vmatpush.msra.mxu0 0.0
        %1078 = vmatpush.msra.mxu0 0.0
        %1079 = vmatpush.msra.mxu0 0.0
        %1080 = vmatpush.msra.mxu0 0.0
        %1081 = vmatpush.msra.mxu0 0.0
        %1082 = vmatpush.msra.mxu0 0.0
        %1083 = vmatpush.msra.mxu0 0.0
        %1084 = vmatpush.msra.mxu0 0.0
        %1085 = vmatpush.msra.mxu0 0.0
        %1086 = vmatpush.msra.mxu0 %v683
        %1087 = vmatmul.f32.gmra.mxu0 %v1069
        %v1088 = vpop.f32.mrf.mxu0
        %v1089 = vadd.f32 0.0, %v1088
        %1090 = vdwg.mxu0
        %v1092 = vsel %vm887, %v973, 0
        %1094 = vmatpush.msra.mxu0 0.0
        %1095 = vmatpush.msra.mxu0 0.0
        %1096 = vmatpush.msra.mxu0 0.0
        %1097 = vmatpush.msra.mxu0 0.0
        %1098 = vmatpush.msra.mxu0 0.0
        %1099 = vmatpush.msra.mxu0 0.0
        %1100 = vmatpush.msra.mxu0 0.0
        %1101 = vmatpush.msra.mxu0 0.0
        %1102 = vmatpush.msra.mxu0 0.0
        %1103 = vmatpush.msra.mxu0 0.0
        %1104 = vmatpush.msra.mxu0 0.0
        %1105 = vmatpush.msra.mxu0 0.0
        %1106 = vmatpush.msra.mxu0 0.0
        %1107 = vmatpush.msra.mxu0 0.0
        %1108 = vmatpush.msra.mxu0 0.0
        %1109 = vmatpush.msra.mxu0 %v686
        %1110 = vmatmul.f32.gmra.mxu0 %v1092
        %v1111 = vpop.f32.mrf.mxu0
        %v1112 = vadd.f32 0.0, %v1111
        %1113 = vdwg.mxu0
        %v1115 = vsel %vm887, %v974, 0
        %1117 = vmatpush.msra.mxu0 0.0
        %1118 = vmatpush.msra.mxu0 0.0
        %1119 = vmatpush.msra.mxu0 0.0
        %1120 = vmatpush.msra.mxu0 0.0
        %1121 = vmatpush.msra.mxu0 0.0
        %1122 = vmatpush.msra.mxu0 0.0
        %1123 = vmatpush.msra.mxu0 0.0
        %1124 = vmatpush.msra.mxu0 0.0
        %1125 = vmatpush.msra.mxu0 0.0
        %1126 = vmatpush.msra.mxu0 0.0
        %1127 = vmatpush.msra.mxu0 0.0
        %1128 = vmatpush.msra.mxu0 0.0
        %1129 = vmatpush.msra.mxu0 0.0
        %1130 = vmatpush.msra.mxu0 0.0
        %1131 = vmatpush.msra.mxu0 0.0
        %1132 = vmatpush.msra.mxu0 %v689
        %1133 = vmatmul.f32.gmra.mxu0 %v1115
        %v1134 = vpop.f32.mrf.mxu0
        %v1135 = vadd.f32 0.0, %v1134
        %1136 = vdwg.mxu0
        %v1138 = vsel %vm887, %v975, 0
        %1140 = vmatpush.msra.mxu0 0.0
        %1141 = vmatpush.msra.mxu0 0.0
        %1142 = vmatpush.msra.mxu0 0.0
        %1143 = vmatpush.msra.mxu0 0.0
        %1144 = vmatpush.msra.mxu0 0.0
        %1145 = vmatpush.msra.mxu0 0.0
        %1146 = vmatpush.msra.mxu0 0.0
        %1147 = vmatpush.msra.mxu0 0.0
        %1148 = vmatpush.msra.mxu0 0.0
        %1149 = vmatpush.msra.mxu0 0.0
        %1150 = vmatpush.msra.mxu0 0.0
        %1151 = vmatpush.msra.mxu0 0.0
        %1152 = vmatpush.msra.mxu0 0.0
        %1153 = vmatpush.msra.mxu0 0.0
        %1154 = vmatpush.msra.mxu0 0.0
        %1155 = vmatpush.msra.mxu0 %v692
        %1156 = vmatmul.f32.gmra.mxu0 %v1138
        %v1157 = vpop.f32.mrf.mxu0
        %v1158 = vadd.f32 0.0, %v1157
        %1159 = vdwg.mxu0
        %1161 = vrot.lane.b32.xlu0 %v1020, 4
        %v1162 = vpop.permute.xlu0 %1161
        %1165 = vrot.lane.b32.xlu0 %v1043, 8
        %v1166 = vpop.permute.xlu0 %1165
        %1169 = vrot.lane.b32.xlu0 %v1066, 12
        %v1170 = vpop.permute.xlu0 %1169
        %1173 = vrot.lane.b32.xlu0 %v1089, 16
        %v1174 = vpop.permute.xlu0 %1173
        %1177 = vrot.lane.b32.xlu0 %v1112, 20
        %v1178 = vpop.permute.xlu0 %1177
        %1181 = vrot.lane.b32.xlu0 %v1135, 24
        %v1182 = vpop.permute.xlu0 %1181
        %1185 = vrot.lane.b32.xlu0 %v1158, 28
        %v1186 = vpop.permute.xlu0 %1185
        %v1188 = vsel %vm694, %v997, %v1162
        %v1189 = vsel %vm887, %v1188, %v1166
        %vm1190 = vcmask 97280
        %v1191 = vsel %vm1190, %v1189, %v1170
        %vm1192 = vcmask 130048
        %v1193 = vsel %vm1192, %v1191, %v1174
        %vm1194 = vcmask 162816
        %v1195 = vsel %vm1194, %v1193, %v1178
        %vm1196 = vcmask 195584
        %v1197 = vsel %vm1196, %v1195, %v1182
        %vm1198 = vcmask 228352
        %v1199 = vsel %vm1198, %v1197, %v1186
        %v1200 = vld [vmem:[#allocation13] sm:$0xff]
        %v1201 = vld [vmem:[#allocation13 + $0x8] sm:$0xff]
        %v1202 = vld [vmem:[#allocation13 + $0x10] sm:$0xff]
        %v1203 = vld [vmem:[#allocation13 + $0x18] sm:$0xff]
        %v1204 = vld [vmem:[%s10] sm:$0x1]
        %v1206 = vperm.slane %v1204, 0
        %v1209 = vsel %vm556, %v1199, 0
        %1211 = vmatpush.msra.mxu0 0.0
        %1212 = vmatpush.msra.mxu0 0.0
        %1213 = vmatpush.msra.mxu0 0.0
        %1214 = vmatpush.msra.mxu0 0.0
        %1215 = vmatpush.msra.mxu0 0.0
        %1216 = vmatpush.msra.mxu0 0.0
        %1217 = vmatpush.msra.mxu0 0.0
        %1218 = vmatpush.msra.mxu0 0.0
        %1219 = vmatpush.msra.mxu0 0.0
        %1220 = vmatpush.msra.mxu0 0.0
        %1221 = vmatpush.msra.mxu0 0.0
        %1222 = vmatpush.msra.mxu0 0.0
        %1223 = vmatpush.msra.mxu0 %v1203
        %1224 = vmatpush.msra.mxu0 %v1202
        %1225 = vmatpush.msra.mxu0 %v1201
        %1226 = vmatpush.msra.mxu0 %v1200
        %1227 = vmatmul.f32.gmra.mxu0 %v1209
        %v1228 = vpop.f32.mrf.mxu0
        %v1229 = vadd.f32 %v1206, %v1228
        %1230 = vdwg.mxu0
        %1231 = vst.msk [vmem:[%s544] sm:$0xff] %vm556, %v1229
        %s1232 = sand.u32 %s287, 1
        %s1233 = scalar_lea.sflag [#allocation4], %s1232
        %s1234 = sand.u32 %s287, 1
        %s1235 = smul.addr %s1234, 8
        %s1236 = scalar_lea.vmem [#allocation14], %s1235
        // Predicated region
        $region93: #{tpu_custom_call.1} parent=63 // pred_check
          %p1237 = pneg %p297
        $region94: #{tpu_custom_call.1} parent=63 // pred_check_branch
          %1239 = sbr.rel (%p1237) target = $region96
        $region95: #{tpu_custom_call.1} parent=63 // pred_region
          %1241 = vsyncadd %s1233, 0
          %s1242 = smul.addr %s33, 8
          %s1243 = scalar_lea.hbm %s11, %s1242
          %s1245 = sshll.u32 %s1236, 4
          %s1246 = int_to_ptr.vmem [resolvable:$true] %s1245
          %s1247 = sshll.u32 %s1243, 4
          %s1248 = int_to_ptr.hbm [resolvable:$true] %s1247
          %1250 = dma.vmem_to_hbm [thread:$0]  %s1246, 128, %s1248, %s1233
        $region96: #{tpu_custom_call.1} parent=63 // pred_fallthru
          _
      $region64: #{tpu_custom_call.1} parent=5 // pred_fallthru
        _
      %p1251 = scmp.le.s32.totalorder 2, %s28
      // Predicated region
      $region97: #{tpu_custom_call.1} parent=5 // pred_check
        %p1252 = pneg %p1251
      $region98: #{tpu_custom_call.1} parent=5 // pred_check_branch
        %1254 = sbr.rel (%p1252) target = $region100
      $region99: #{tpu_custom_call.1} parent=5 // pred_region
        %s1255 = ssub.s32 %s28, 2
        // Predicated region
        $region101: #{tpu_custom_call.1} parent=99 // pred_check
          %p1256 = pneg %p303
        $region102: #{tpu_custom_call.1} parent=99 // pred_check_branch
          %1258 = sbr.rel (%p1256) target = $region104
        $region103: #{tpu_custom_call.1} parent=99 // pred_region
          %s1259 = sand.u32 %s288, 1
          %s1260 = scalar_lea.sflag [#allocation4], %s1259
          %s1261 = sand.u32 %s288, 1
          %s1262 = smul.addr %s1261, 8
          %s1263 = scalar_lea.vmem [#allocation14], %s1262
          %1265 = dma.done %s1260, 128
        $region104: #{tpu_custom_call.1} parent=99 // pred_fallthru
          _
      $region100: #{tpu_custom_call.1} parent=5 // pred_fallthru
        _
    $region6: #{tpu_custom_call.1} parent=1 // loop_footer
      %s32 = sadd.s32 1, %s28
    $region7: #{tpu_custom_call.1} parent=1 // loop_footer_branch
      %27 = sbr.rel target = $region3
    $region8: #{tpu_custom_call.1} parent=1 // loop_exit
      _
    %1266 = vsyncpa [#allocation3], 1
    %s1267 = scalar_lea.sflag [#allocation3], 1
    %1268 = vsyncpa %s1267, 1
    %1269 = vsyncpa [#allocation6], 1
    %s1270 = scalar_lea.sflag [#allocation6], 1
    %1271 = vsyncpa %s1270, 1
    %1272 = vsyncpa [#allocation9], 1
    %1273 = vsyncpa [#allocation12], 1
    %1274 = vsyncpa [#allocation4], 1
    %s1275 = scalar_lea.sflag [#allocation4], 1
    %1276 = vsyncpa %s1275, 1

</llo_original>
